<compile_context>
chip_gen: v7x
topology: tpu7x:2x2x1
jax: 0.10.0
libtpu: 0.0.40
codegen_flags: <defaults>
</compile_context>

<pallas_src>
import math

import jax
import jax.numpy as jnp
from jax.experimental import pallas as pl
from jax.experimental.pallas import tpu as pltpu

# ----------------------------- config --------------------------------------
BATCH = 2
SEQ = 8
HIDDEN = 32
N_HEADS = 2
D_HEAD = HIDDEN // N_HEADS
FFN = 64
VOCAB = 128
N_LAYERS = 2
N_SENT = 2
LN_EPS = 1e-12
PV = max(3 * HIDDEN, FFN)      # packed per-layer param slab width (96)


# --------------------------- in-kernel helpers -------------------------------
def _layernorm(h, g, b):
    mean = jnp.mean(h, axis=-1, keepdims=True)
    var = jnp.mean((h - mean) ** 2, axis=-1, keepdims=True)
    return (h - mean) * jax.lax.rsqrt(var + LN_EPS) * g + b


def _gelu(x):
    # tanh-approximate GELU (HF bert default is erf-GELU; difference is tiny).
    c = math.sqrt(2.0 / math.pi)
    return 0.5 * x * (1.0 + jnp.tanh(c * (x + 0.044715 * x * x * x)))


# ---------------- fused encoder + pooling + cos/MSE kernel -------------------
def _sbert_kernel(emb_ref, bias_ref, wpool_ref, label_ref, emb_ln_ref,
                  wqkv_ref, wo_ref, w1_ref, w2_ref, pvec_ref,
                  loss_ref, x_scr):
    lyr = pl.program_id(0)
    n_layers = pl.num_programs(0)
    SB, L, H = emb_ref.shape          # SB = N_SENT * BATCH
    M = SB * L
    B = SB // N_SENT
    scale = 1.0 / math.sqrt(D_HEAD)

    # First grid step: embedding LayerNorm straight into the VMEM activation
    # scratch (activation stays resident across the whole layer loop).
    @pl.when(lyr == 0)
    def _():
        e = emb_ref[...].reshape(M, H)
        ln = emb_ln_ref[...]
        x_scr[...] = _layernorm(e, ln[0:1, :], ln[1:2, :])

    x = x_scr[...]                                     # (M, H) fp32, in VMEM

    # Unpack the packed per-layer small-param slab (one DMA instead of eight).
    pv = pvec_ref[0]                                   # (8, PV) fp32
    bqkv = pv[0:1, :3 * H]
    bo = pv[1:2, :H]
    ln1_g, ln1_b = pv[2:3, :H], pv[3:4, :H]
    b1 = pv[4:5, :FFN]
    b2 = pv[5:6, :H]
    ln2_g, ln2_b = pv[6:7, :H], pv[7:8, :H]

    # Fused QKV projection: single (M,H)x(H,3H) bf16 MXU pass, fp32 accumulate.
    xb = x.astype(jnp.bfloat16)
    qkv = jnp.dot(xb, wqkv_ref[0], preferred_element_type=jnp.float32) + bqkv
    bias = bias_ref[...]                               # (SB, 1, L) fp32 key mask
    wo = wo_ref[0]                                     # (H, H) bf16

    # TODO(synk): fully head-batched attention needs a 2-batch-dim dot_general;
    # kept as a 2-iteration static loop of single-batch-dim einsums for Mosaic
    # lowering safety.  The lane-concat of head contexts is removed by using
    # per-head row slices of Wo instead.
    attn_out = None
    for h in range(N_HEADS):
        qh = qkv[:, h * D_HEAD:(h + 1) * D_HEAD].reshape(SB, L, D_HEAD)
        kh = qkv[:, H + h * D_HEAD:H + (h + 1) * D_HEAD].reshape(SB, L, D_HEAD)
        vh = qkv[:, 2 * H + h * D_HEAD:2 * H + (h + 1) * D_HEAD].reshape(SB, L, D_HEAD)
        s = jnp.einsum('bqd,bkd->bqk',
                       qh.astype(jnp.bfloat16), kh.astype(jnp.bfloat16),
                       preferred_element_type=jnp.float32) * scale + bias
        m = jnp.max(s, axis=-1, keepdims=True)
        p = jnp.exp(s - m)
        p = p / jnp.sum(p, axis=-1, keepdims=True)     # exact div (parity)
        ctx = jnp.einsum('bqk,bkd->bqd',
                         p.astype(jnp.bfloat16), vh.astype(jnp.bfloat16),
                         preferred_element_type=jnp.float32).reshape(M, D_HEAD)
        part = jnp.dot(ctx.astype(jnp.bfloat16),
                       wo[h * D_HEAD:(h + 1) * D_HEAD, :],
                       preferred_element_type=jnp.float32)
        attn_out = part if attn_out is None else attn_out + part

    x1 = _layernorm(x + attn_out + bo, ln1_g, ln1_b)

    hidden = _gelu(jnp.dot(x1.astype(jnp.bfloat16), w1_ref[0],
                           preferred_element_type=jnp.float32) + b1)
    ffn_out = jnp.dot(hidden.astype(jnp.bfloat16), w2_ref[0],
                      preferred_element_type=jnp.float32) + b2
    x2 = _layernorm(x1 + ffn_out, ln2_g, ln2_b)
    x_scr[...] = x2

    # Last layer: idf-weighted masked mean pooling + cosine similarity + MSE,
    # all in-kernel.  Only the scalar loss leaves VMEM.
    @pl.when(lyr == n_layers - 1)
    def _():
        seq = x2.reshape(SB, L, H)
        w = wpool_ref[...][:, :, None]                 # mask*idf / clamp(sum mask)
        pooled = jnp.sum(seq * w, axis=1)              # (SB, H)
        v1 = pooled[:B]                                # sentence 1 vectors (B, H)
        v2 = pooled[B:]                                # sentence 2 vectors (B, H)
        dot = jnp.sum(v1 * v2, axis=-1, keepdims=True)
        n1 = jnp.sqrt(jnp.sum(v1 * v1, axis=-1, keepdims=True))
        n2 = jnp.sqrt(jnp.sum(v2 * v2, axis=-1, keepdims=True))
        denom = jnp.maximum(n1, 1e-8) * jnp.maximum(n2, 1e-8)
        cos = dot / denom                              # exact div (parity)
        diff = cos - label_ref[...]                    # (B, 1)
        loss_ref[...] = jnp.sum(diff * diff, keepdims=True) * (1.0 / B)


def encoder_loss(params, emb, bias, wpool, label):
    SB, L, H = emb.shape

    const2 = lambda l: (0, 0)
    const3 = lambda l: (0, 0, 0)
    per_layer = lambda l: (l, 0, 0)

    loss = pl.pallas_call(
        _sbert_kernel,
        grid=(N_LAYERS,),
        in_specs=[
            pl.BlockSpec((SB, L, H), const3),          # embeddings (pre-LN)
            pl.BlockSpec((SB, 1, L), const3),          # attention mask bias
            pl.BlockSpec((SB, L), const2),             # pooling weights
            pl.BlockSpec((BATCH, 1), const2),          # labels
            pl.BlockSpec((2, H), const2),              # emb LN gamma/beta
            pl.BlockSpec((1, H, 3 * H), per_layer),    # fused Wqkv (bf16)
            pl.BlockSpec((1, H, H), per_layer),        # Wo (bf16)
            pl.BlockSpec((1, H, FFN), per_layer),      # W1 (bf16)
            pl.BlockSpec((1, FFN, H), per_layer),      # W2 (bf16)
            pl.BlockSpec((1, 8, PV), per_layer),       # packed per-layer vectors
        ],
        out_specs=pl.BlockSpec((1, 1), const2),
        out_shape=jax.ShapeDtypeStruct((1, 1), jnp.float32),
        scratch_shapes=[pltpu.VMEM((SB * L, H), jnp.float32)],
        compiler_params=pltpu.CompilerParams(
            dimension_semantics=("arbitrary",)),
    )(emb, bias, wpool, label, params["emb_ln"],
      params["wqkv"], params["wo"], params["w1"], params["w2"], params["pvec"])
    return loss[0, 0]


# ------------------------------- forward -------------------------------------
def sbert_forward(params, idf_table, in1, in1m, in2, in2m, label):
    B, L = in1.shape
    ids = jnp.concatenate([in1, in2], axis=0)                    # (2B, L)
    masks = jnp.concatenate([in1m, in2m], axis=0).astype(jnp.float32)

    # TODO(synk): word/pos/type embedding and idf-table gathers stay in XLA glue
    # (data-dependent row gather; tiny compared to the fused encoder kernel).
    emb = (params["word_emb"][ids]
           + params["pos_emb"][None, :L, :]
           + params["type_emb"][0][None, None, :])               # (2B, L, H)

    bias = ((1.0 - masks) * -10000.0)[:, None, :]                # (2B, 1, L)
    cnt = jnp.maximum(jnp.sum(masks, axis=1, keepdims=True), 1e-9)
    wpool = masks * idf_table[ids] / cnt                         # (2B, L)

    return encoder_loss(params, emb, bias, wpool,
                        label.reshape(B, 1).astype(jnp.float32))


# --------------------------- deterministic params ---------------------------
def init_params(key):
    keys = jax.random.split(key, 8)
    it = iter(keys)

    def w(shape):
        return jax.random.normal(next(it), shape, jnp.float32) * 0.02

    # Packed per-layer small params: rows = [bqkv, bo, ln1_g, ln1_b, b1, b2,
    # ln2_g, ln2_b], padded to width PV.  Biases zero, LN gammas one.
    pvec = jnp.zeros((N_LAYERS, 8, PV), jnp.float32)
    pvec = pvec.at[:, 2, :HIDDEN].set(1.0)   # ln1_g
    pvec = pvec.at[:, 6, :HIDDEN].set(1.0)   # ln2_g

    emb_ln = jnp.concatenate([jnp.ones((1, HIDDEN), jnp.float32),
                              jnp.zeros((1, HIDDEN), jnp.float32)], axis=0)

    return {
        "word_emb": w((VOCAB, HIDDEN)),
        "pos_emb": w((SEQ, HIDDEN)),
        "type_emb": w((2, HIDDEN)),
        "emb_ln": emb_ln,
        "wqkv": w((N_LAYERS, HIDDEN, 3 * HIDDEN)).astype(jnp.bfloat16),
        "wo": w((N_LAYERS, HIDDEN, HIDDEN)).astype(jnp.bfloat16),
        "w1": w((N_LAYERS, HIDDEN, FFN)).astype(jnp.bfloat16),
        "w2": w((N_LAYERS, FFN, HIDDEN)).astype(jnp.bfloat16),
        "pvec": pvec,
    }


def build_idf_table():
    # Deterministic synthetic idf dict (stand-in for the module's `idf`).
    idf = {t: (t % 7) + 1 for t in range(0, VOCAB, 3)}
    tab = [
        math.log(5821.0 / (1.0 + idf[t]), 2) if t in idf else math.log(5821.0, 2)
        for t in range(VOCAB)
    ]
    return jnp.array(tab, dtype=jnp.float32)


# ------------------------------------ main -----------------------------------
if __name__ == "__main__":
    key = jax.random.PRNGKey(0)
    k_ids1, k_ids2, k_lab, k_params = jax.random.split(key, 4)

    in1 = jax.random.randint(k_ids1, (BATCH, SEQ), 0, VOCAB, dtype=jnp.int32)
    in2 = jax.random.randint(k_ids2, (BATCH, SEQ), 0, VOCAB, dtype=jnp.int32)
    lens1 = jnp.array([6, 4])
    lens2 = jnp.array([8, 5])
    in1m = (jnp.arange(SEQ)[None, :] < lens1[:, None]).astype(jnp.int32)
    in2m = (jnp.arange(SEQ)[None, :] < lens2[:, None]).astype(jnp.int32)
    label = jax.random.uniform(k_lab, (BATCH,), dtype=jnp.float32)

    params = init_params(k_params)
    idf_table = build_idf_table()

    out = jax.jit(sbert_forward)(params, idf_table, in1, in1m, in2, in2m, label)
    jax.block_until_ready(out)
    print("KERNEL_OK")
</pallas_src>

<mosaic_0001>
module attributes {stable_mosaic.version = 11 : i64} {
  func.func @_sbert_kernel(%arg0: i32, %arg1: memref<4x8x32xf32, #tpu.memory_space<vmem>>, %arg2: memref<4x1x8xf32, #tpu.memory_space<vmem>>, %arg3: memref<4x8xf32, #tpu.memory_space<vmem>>, %arg4: memref<2x1xf32, #tpu.memory_space<vmem>>, %arg5: memref<2x32xf32, #tpu.memory_space<vmem>>, %arg6: memref<1x32x96xbf16, #tpu.memory_space<vmem>>, %arg7: memref<1x32x32xbf16, #tpu.memory_space<vmem>>, %arg8: memref<1x32x64xbf16, #tpu.memory_space<vmem>>, %arg9: memref<1x64x32xbf16, #tpu.memory_space<vmem>>, %arg10: memref<1x8x96xf32, #tpu.memory_space<vmem>>, %arg11: memref<1x1xf32, #tpu.memory_space<vmem>>, %arg12: memref<32x32xf32, #tpu.memory_space<vmem>>) attributes {dimension_semantics = [#tpu.dimension_semantics<arbitrary>], iteration_bounds = array<i64: 2>, scalar_prefetch = 0 : i64, scratch_operands = 1 : i64, tpu.core_type = #tpu.core_type<tc>, window_params = [{pipeline_mode = #tpu.pipeline_mode<synchronous>, transform_indices = @transform_0, window_bounds = array<i64: 4, 8, 32>}, {pipeline_mode = #tpu.pipeline_mode<synchronous>, transform_indices = @transform_1, window_bounds = array<i64: 4, 1, 8>}, {pipeline_mode = #tpu.pipeline_mode<synchronous>, transform_indices = @transform_2, window_bounds = array<i64: 4, 8>}, {pipeline_mode = #tpu.pipeline_mode<synchronous>, transform_indices = @transform_3, window_bounds = array<i64: 2, 1>}, {pipeline_mode = #tpu.pipeline_mode<synchronous>, transform_indices = @transform_4, window_bounds = array<i64: 2, 32>}, {transform_indices = @transform_5, window_bounds = array<i64: 1, 32, 96>}, {transform_indices = @transform_6, window_bounds = array<i64: 1, 32, 32>}, {transform_indices = @transform_7, window_bounds = array<i64: 1, 32, 64>}, {transform_indices = @transform_8, window_bounds = array<i64: 1, 64, 32>}, {transform_indices = @transform_9, window_bounds = array<i64: 1, 8, 96>}, {pipeline_mode = #tpu.pipeline_mode<synchronous>, transform_indices = @transform_10, window_bounds = array<i64: 1, 1>}]} {
    %c0_i32 = arith.constant 0 : i32
    %0 = arith.cmpi eq, %arg0, %c0_i32 : i32
    %1 = arith.extui %0 : i1 to i32
    %c0_i32_0 = arith.constant 0 : i32
    %2 = arith.cmpi ne, %1, %c0_i32_0 : i32
    scf.if %2 {
      %c0_51 = arith.constant 0 : index
      %c0_52 = arith.constant 0 : index
      %c0_53 = arith.constant 0 : index
      %159 = vector.load %arg1[%c0_51, %c0_52, %c0_53] : memref<4x8x32xf32, #tpu.memory_space<vmem>>, vector<4x8x32xf32>
      %160 = vector.shape_cast %159 : vector<4x8x32xf32> to vector<32x32xf32>
      %c0_54 = arith.constant 0 : index
      %c0_55 = arith.constant 0 : index
      %161 = vector.load %arg5[%c0_54, %c0_55] : memref<2x32xf32, #tpu.memory_space<vmem>>, vector<2x32xf32>
      %162 = vector.extract_strided_slice %161 {offsets = [0, 0], sizes = [1, 32], strides = [1, 1]} : vector<2x32xf32> to vector<1x32xf32>
      %163 = vector.extract_strided_slice %161 {offsets = [1, 0], sizes = [1, 32], strides = [1, 1]} : vector<2x32xf32> to vector<1x32xf32>
      %cst_56 = arith.constant dense<0.000000e+00> : vector<32xf32>
      %164 = vector.multi_reduction <add>, %160, %cst_56 [1] : vector<32x32xf32> to vector<32xf32>
      %165 = vector.shape_cast %164 : vector<32xf32> to vector<32x1xf32>
      %cst_57 = arith.constant 3.200000e+01 : f32
      %166 = vector.broadcast %cst_57 : f32 to vector<32x1xf32>
      %167 = arith.divf %165, %166 : vector<32x1xf32>
      %168 = vector.broadcast %167 : vector<32x1xf32> to vector<32x32xf32>
      %169 = arith.subf %160, %168 : vector<32x32xf32>
      %170 = arith.mulf %169, %169 : vector<32x32xf32>
      %cst_58 = arith.constant dense<0.000000e+00> : vector<32xf32>
      %171 = vector.multi_reduction <add>, %170, %cst_58 [1] : vector<32x32xf32> to vector<32xf32>
      %172 = vector.shape_cast %171 : vector<32xf32> to vector<32x1xf32>
      %cst_59 = arith.constant 3.200000e+01 : f32
      %173 = vector.broadcast %cst_59 : f32 to vector<32x1xf32>
      %174 = arith.divf %172, %173 : vector<32x1xf32>
      %175 = vector.broadcast %167 : vector<32x1xf32> to vector<32x32xf32>
      %176 = arith.subf %160, %175 : vector<32x32xf32>
      %cst_60 = arith.constant 9.99999996E-13 : f32
      %177 = vector.broadcast %cst_60 : f32 to vector<32x1xf32>
      %178 = arith.addf %174, %177 : vector<32x1xf32>
      %179 = math.rsqrt %178 : vector<32x1xf32>
      %180 = vector.broadcast %179 : vector<32x1xf32> to vector<32x32xf32>
      %181 = arith.mulf %176, %180 : vector<32x32xf32>
      %182 = vector.broadcast %162 : vector<1x32xf32> to vector<32x32xf32>
      %183 = arith.mulf %181, %182 : vector<32x32xf32>
      %184 = vector.broadcast %163 : vector<1x32xf32> to vector<32x32xf32>
      %185 = arith.addf %183, %184 : vector<32x32xf32>
      %c0_61 = arith.constant 0 : index
      %c0_62 = arith.constant 0 : index
      %186 = vector.load %arg12[%c0_61, %c0_62] : memref<32x32xf32, #tpu.memory_space<vmem>>, vector<32x32xf32>
      tpu.vector_store %arg12[%c0_61, %c0_62], %185 {strides = array<i32>} : memref<32x32xf32, #tpu.memory_space<vmem>>, vector<32x32xf32>,
    } else {
    }
    %c0 = arith.constant 0 : index
    %c0_1 = arith.constant 0 : index
    %3 = vector.load %arg12[%c0, %c0_1] : memref<32x32xf32, #tpu.memory_space<vmem>>, vector<32x32xf32>
    %c0_2 = arith.constant 0 : index
    %c0_3 = arith.constant 0 : index
    %c0_4 = arith.constant 0 : index
    %4 = vector.load %arg10[%c0_2, %c0_3, %c0_4] : memref<1x8x96xf32, #tpu.memory_space<vmem>>, vector<1x8x96xf32>
    %5 = vector.shape_cast %4 : vector<1x8x96xf32> to vector<8x96xf32>
    %6 = vector.extract_strided_slice %5 {offsets = [0, 0], sizes = [1, 96], strides = [1, 1]} : vector<8x96xf32> to vector<1x96xf32>
    %7 = vector.extract_strided_slice %5 {offsets = [1, 0], sizes = [1, 32], strides = [1, 1]} : vector<8x96xf32> to vector<1x32xf32>
    %8 = vector.extract_strided_slice %5 {offsets = [2, 0], sizes = [1, 32], strides = [1, 1]} : vector<8x96xf32> to vector<1x32xf32>
    %9 = vector.extract_strided_slice %5 {offsets = [3, 0], sizes = [1, 32], strides = [1, 1]} : vector<8x96xf32> to vector<1x32xf32>
    %10 = vector.extract_strided_slice %5 {offsets = [4, 0], sizes = [1, 64], strides = [1, 1]} : vector<8x96xf32> to vector<1x64xf32>
    %11 = vector.extract_strided_slice %5 {offsets = [5, 0], sizes = [1, 32], strides = [1, 1]} : vector<8x96xf32> to vector<1x32xf32>
    %12 = vector.extract_strided_slice %5 {offsets = [6, 0], sizes = [1, 32], strides = [1, 1]} : vector<8x96xf32> to vector<1x32xf32>
    %13 = vector.extract_strided_slice %5 {offsets = [7, 0], sizes = [1, 32], strides = [1, 1]} : vector<8x96xf32> to vector<1x32xf32>
    %14 = arith.truncf %3 : vector<32x32xf32> to vector<32x32xbf16>
    %c0_5 = arith.constant 0 : index
    %c0_6 = arith.constant 0 : index
    %c0_7 = arith.constant 0 : index
    %15 = vector.load %arg6[%c0_5, %c0_6, %c0_7] : memref<1x32x96xbf16, #tpu.memory_space<vmem>>, vector<1x32x96xbf16>
    %16 = vector.shape_cast %15 : vector<1x32x96xbf16> to vector<32x96xbf16>
    %cst = arith.constant dense<0.000000e+00> : vector<32x96xf32>
    %17 = tpu.matmul %14, %16, %cst {dimension_numbers = #tpu.dot_dimension_numbers<[1], [0], [0], [1], [0, 0, 1, 1], [], []>} : vector<32x32xbf16>, vector<32x96xbf16>, vector<32x96xf32> -> vector<32x96xf32>
    %18 = vector.broadcast %6 : vector<1x96xf32> to vector<32x96xf32>
    %19 = arith.addf %17, %18 : vector<32x96xf32>
    %c0_8 = arith.constant 0 : index
    %c0_9 = arith.constant 0 : index
    %c0_10 = arith.constant 0 : index
    %20 = vector.load %arg2[%c0_8, %c0_9, %c0_10] : memref<4x1x8xf32, #tpu.memory_space<vmem>>, vector<4x1x8xf32>
    %c0_11 = arith.constant 0 : index
    %c0_12 = arith.constant 0 : index
    %c0_13 = arith.constant 0 : index
    %21 = vector.load %arg7[%c0_11, %c0_12, %c0_13] : memref<1x32x32xbf16, #tpu.memory_space<vmem>>, vector<1x32x32xbf16>
    %22 = vector.shape_cast %21 : vector<1x32x32xbf16> to vector<32x32xbf16>
    %23 = vector.extract_strided_slice %19 {offsets = [0, 0], sizes = [32, 16], strides = [1, 1]} : vector<32x96xf32> to vector<32x16xf32>
    %24 = vector.shape_cast %23 : vector<32x16xf32> to vector<4x8x16xf32>
    %25 = vector.extract_strided_slice %19 {offsets = [0, 32], sizes = [32, 16], strides = [1, 1]} : vector<32x96xf32> to vector<32x16xf32>
    %26 = vector.shape_cast %25 : vector<32x16xf32> to vector<4x8x16xf32>
    %27 = vector.extract_strided_slice %19 {offsets = [0, 64], sizes = [32, 16], strides = [1, 1]} : vector<32x96xf32> to vector<32x16xf32>
    %28 = vector.shape_cast %27 : vector<32x16xf32> to vector<4x8x16xf32>
    %29 = arith.truncf %24 : vector<4x8x16xf32> to vector<4x8x16xbf16>
    %30 = arith.truncf %26 : vector<4x8x16xf32> to vector<4x8x16xbf16>
    "tpu.trace_start"() <{level = 10 : i32, message = "bqd,bkd->bqk"}> : () -> ()
    %cst_14 = arith.constant dense<0.000000e+00> : vector<4x8x8xf32>
    %31 = tpu.matmul %29, %30, %cst_14 {dimension_numbers = #tpu.dot_dimension_numbers<[2], [2], [1], [1], [0, 0, 0, 1, 1, 1], [0], [0]>} : vector<4x8x16xbf16>, vector<4x8x16xbf16>, vector<4x8x8xf32> -> vector<4x8x8xf32>
    "tpu.trace_stop"() : () -> ()
    %cst_15 = arith.constant 2.500000e-01 : f32
    %32 = vector.broadcast %cst_15 : f32 to vector<4x8x8xf32>
    %33 = arith.mulf %31, %32 : vector<4x8x8xf32>
    %34 = vector.broadcast %20 : vector<4x1x8xf32> to vector<4x8x8xf32>
    %35 = arith.addf %33, %34 : vector<4x8x8xf32>
    %cst_16 = arith.constant dense<0xFF800000> : vector<4x8xf32>
    %36 = vector.multi_reduction <maximumf>, %35, %cst_16 [2] : vector<4x8x8xf32> to vector<4x8xf32>
    %37 = vector.shape_cast %36 : vector<4x8xf32> to vector<4x8x1xf32>
    %38 = vector.broadcast %37 : vector<4x8x1xf32> to vector<4x8x8xf32>
    %39 = arith.subf %35, %38 : vector<4x8x8xf32>
    %40 = math.exp %39 : vector<4x8x8xf32>
    %cst_17 = arith.constant dense<0.000000e+00> : vector<4x8xf32>
    %41 = vector.multi_reduction <add>, %40, %cst_17 [2] : vector<4x8x8xf32> to vector<4x8xf32>
    %42 = vector.shape_cast %41 : vector<4x8xf32> to vector<4x8x1xf32>
    %43 = vector.broadcast %42 : vector<4x8x1xf32> to vector<4x8x8xf32>
    %44 = arith.divf %40, %43 : vector<4x8x8xf32>
    %45 = arith.truncf %44 : vector<4x8x8xf32> to vector<4x8x8xbf16>
    %46 = arith.truncf %28 : vector<4x8x16xf32> to vector<4x8x16xbf16>
    "tpu.trace_start"() <{level = 10 : i32, message = "bqk,bkd->bqd"}> : () -> ()
    %cst_18 = arith.constant dense<0.000000e+00> : vector<4x8x16xf32>
    %47 = tpu.matmul %45, %46, %cst_18 {dimension_numbers = #tpu.dot_dimension_numbers<[2], [1], [1], [2], [0, 0, 0, 1, 1, 2], [0], [0]>} : vector<4x8x8xbf16>, vector<4x8x16xbf16>, vector<4x8x16xf32> -> vector<4x8x16xf32>
    "tpu.trace_stop"() : () -> ()
    %48 = vector.shape_cast %47 : vector<4x8x16xf32> to vector<32x16xf32>
    %49 = arith.truncf %48 : vector<32x16xf32> to vector<32x16xbf16>
    %50 = vector.extract_strided_slice %22 {offsets = [0, 0], sizes = [16, 32], strides = [1, 1]} : vector<32x32xbf16> to vector<16x32xbf16>
    %cst_19 = arith.constant dense<0.000000e+00> : vector<32x32xf32>
    %51 = tpu.matmul %49, %50, %cst_19 {dimension_numbers = #tpu.dot_dimension_numbers<[1], [0], [0], [1], [0, 0, 1, 1], [], []>} : vector<32x16xbf16>, vector<16x32xbf16>, vector<32x32xf32> -> vector<32x32xf32>
    %52 = vector.extract_strided_slice %19 {offsets = [0, 16], sizes = [32, 16], strides = [1, 1]} : vector<32x96xf32> to vector<32x16xf32>
    %53 = vector.shape_cast %52 : vector<32x16xf32> to vector<4x8x16xf32>
    %54 = vector.extract_strided_slice %19 {offsets = [0, 48], sizes = [32, 16], strides = [1, 1]} : vector<32x96xf32> to vector<32x16xf32>
    %55 = vector.shape_cast %54 : vector<32x16xf32> to vector<4x8x16xf32>
    %56 = vector.extract_strided_slice %19 {offsets = [0, 80], sizes = [32, 16], strides = [1, 1]} : vector<32x96xf32> to vector<32x16xf32>
    %57 = vector.shape_cast %56 : vector<32x16xf32> to vector<4x8x16xf32>
    %58 = arith.truncf %53 : vector<4x8x16xf32> to vector<4x8x16xbf16>
    %59 = arith.truncf %55 : vector<4x8x16xf32> to vector<4x8x16xbf16>
    "tpu.trace_start"() <{level = 10 : i32, message = "bqd,bkd->bqk"}> : () -> ()
    %cst_20 = arith.constant dense<0.000000e+00> : vector<4x8x8xf32>
    %60 = tpu.matmul %58, %59, %cst_20 {dimension_numbers = #tpu.dot_dimension_numbers<[2], [2], [1], [1], [0, 0, 0, 1, 1, 1], [0], [0]>} : vector<4x8x16xbf16>, vector<4x8x16xbf16>, vector<4x8x8xf32> -> vector<4x8x8xf32>
    "tpu.trace_stop"() : () -> ()
    %cst_21 = arith.constant 2.500000e-01 : f32
    %61 = vector.broadcast %cst_21 : f32 to vector<4x8x8xf32>
    %62 = arith.mulf %60, %61 : vector<4x8x8xf32>
    %63 = vector.broadcast %20 : vector<4x1x8xf32> to vector<4x8x8xf32>
    %64 = arith.addf %62, %63 : vector<4x8x8xf32>
    %cst_22 = arith.constant dense<0xFF800000> : vector<4x8xf32>
    %65 = vector.multi_reduction <maximumf>, %64, %cst_22 [2] : vector<4x8x8xf32> to vector<4x8xf32>
    %66 = vector.shape_cast %65 : vector<4x8xf32> to vector<4x8x1xf32>
    %67 = vector.broadcast %66 : vector<4x8x1xf32> to vector<4x8x8xf32>
    %68 = arith.subf %64, %67 : vector<4x8x8xf32>
    %69 = math.exp %68 : vector<4x8x8xf32>
    %cst_23 = arith.constant dense<0.000000e+00> : vector<4x8xf32>
    %70 = vector.multi_reduction <add>, %69, %cst_23 [2] : vector<4x8x8xf32> to vector<4x8xf32>
    %71 = vector.shape_cast %70 : vector<4x8xf32> to vector<4x8x1xf32>
    %72 = vector.broadcast %71 : vector<4x8x1xf32> to vector<4x8x8xf32>
    %73 = arith.divf %69, %72 : vector<4x8x8xf32>
    %74 = arith.truncf %73 : vector<4x8x8xf32> to vector<4x8x8xbf16>
    %75 = arith.truncf %57 : vector<4x8x16xf32> to vector<4x8x16xbf16>
    "tpu.trace_start"() <{level = 10 : i32, message = "bqk,bkd->bqd"}> : () -> ()
    %cst_24 = arith.constant dense<0.000000e+00> : vector<4x8x16xf32>
    %76 = tpu.matmul %74, %75, %cst_24 {dimension_numbers = #tpu.dot_dimension_numbers<[2], [1], [1], [2], [0, 0, 0, 1, 1, 2], [0], [0]>} : vector<4x8x8xbf16>, vector<4x8x16xbf16>, vector<4x8x16xf32> -> vector<4x8x16xf32>
    "tpu.trace_stop"() : () -> ()
    %77 = vector.shape_cast %76 : vector<4x8x16xf32> to vector<32x16xf32>
    %78 = arith.truncf %77 : vector<32x16xf32> to vector<32x16xbf16>
    %79 = vector.extract_strided_slice %22 {offsets = [16, 0], sizes = [16, 32], strides = [1, 1]} : vector<32x32xbf16> to vector<16x32xbf16>
    %cst_25 = arith.constant dense<0.000000e+00> : vector<32x32xf32>
    %80 = tpu.matmul %78, %79, %cst_25 {dimension_numbers = #tpu.dot_dimension_numbers<[1], [0], [0], [1], [0, 0, 1, 1], [], []>} : vector<32x16xbf16>, vector<16x32xbf16>, vector<32x32xf32> -> vector<32x32xf32>
    %81 = arith.addf %51, %80 : vector<32x32xf32>
    %82 = arith.addf %3, %81 : vector<32x32xf32>
    %83 = vector.broadcast %7 : vector<1x32xf32> to vector<32x32xf32>
    %84 = arith.addf %82, %83 : vector<32x32xf32>
    %cst_26 = arith.constant dense<0.000000e+00> : vector<32xf32>
    %85 = vector.multi_reduction <add>, %84, %cst_26 [1] : vector<32x32xf32> to vector<32xf32>
    %86 = vector.shape_cast %85 : vector<32xf32> to vector<32x1xf32>
    %cst_27 = arith.constant 3.200000e+01 : f32
    %87 = vector.broadcast %cst_27 : f32 to vector<32x1xf32>
    %88 = arith.divf %86, %87 : vector<32x1xf32>
    %89 = vector.broadcast %88 : vector<32x1xf32> to vector<32x32xf32>
    %90 = arith.subf %84, %89 : vector<32x32xf32>
    %91 = arith.mulf %90, %90 : vector<32x32xf32>
    %cst_28 = arith.constant dense<0.000000e+00> : vector<32xf32>
    %92 = vector.multi_reduction <add>, %91, %cst_28 [1] : vector<32x32xf32> to vector<32xf32>
    %93 = vector.shape_cast %92 : vector<32xf32> to vector<32x1xf32>
    %cst_29 = arith.constant 3.200000e+01 : f32
    %94 = vector.broadcast %cst_29 : f32 to vector<32x1xf32>
    %95 = arith.divf %93, %94 : vector<32x1xf32>
    %96 = vector.broadcast %88 : vector<32x1xf32> to vector<32x32xf32>
    %97 = arith.subf %84, %96 : vector<32x32xf32>
    %cst_30 = arith.constant 9.99999996E-13 : f32
    %98 = vector.broadcast %cst_30 : f32 to vector<32x1xf32>
    %99 = arith.addf %95, %98 : vector<32x1xf32>
    %100 = math.rsqrt %99 : vector<32x1xf32>
    %101 = vector.broadcast %100 : vector<32x1xf32> to vector<32x32xf32>
    %102 = arith.mulf %97, %101 : vector<32x32xf32>
    %103 = vector.broadcast %8 : vector<1x32xf32> to vector<32x32xf32>
    %104 = arith.mulf %102, %103 : vector<32x32xf32>
    %105 = vector.broadcast %9 : vector<1x32xf32> to vector<32x32xf32>
    %106 = arith.addf %104, %105 : vector<32x32xf32>
    %107 = arith.truncf %106 : vector<32x32xf32> to vector<32x32xbf16>
    %c0_31 = arith.constant 0 : index
    %c0_32 = arith.constant 0 : index
    %c0_33 = arith.constant 0 : index
    %108 = vector.load %arg8[%c0_31, %c0_32, %c0_33] : memref<1x32x64xbf16, #tpu.memory_space<vmem>>, vector<1x32x64xbf16>
    %109 = vector.shape_cast %108 : vector<1x32x64xbf16> to vector<32x64xbf16>
    %cst_34 = arith.constant dense<0.000000e+00> : vector<32x64xf32>
    %110 = tpu.matmul %107, %109, %cst_34 {dimension_numbers = #tpu.dot_dimension_numbers<[1], [0], [0], [1], [0, 0, 1, 1], [], []>} : vector<32x32xbf16>, vector<32x64xbf16>, vector<32x64xf32> -> vector<32x64xf32>
    %111 = vector.broadcast %10 : vector<1x64xf32> to vector<32x64xf32>
    %112 = arith.addf %110, %111 : vector<32x64xf32>
    %cst_35 = arith.constant 5.000000e-01 : f32
    %113 = vector.broadcast %cst_35 : f32 to vector<32x64xf32>
    %114 = arith.mulf %113, %112 : vector<32x64xf32>
    %cst_36 = arith.constant 4.471500e-02 : f32
    %115 = vector.broadcast %cst_36 : f32 to vector<32x64xf32>
    %116 = arith.mulf %115, %112 : vector<32x64xf32>
    %117 = arith.mulf %116, %112 : vector<32x64xf32>
    %118 = arith.mulf %117, %112 : vector<32x64xf32>
    %119 = arith.addf %112, %118 : vector<32x64xf32>
    %cst_37 = arith.constant 0.797884583 : f32
    %120 = vector.broadcast %cst_37 : f32 to vector<32x64xf32>
    %121 = arith.mulf %120, %119 : vector<32x64xf32>
    %122 = math.tanh %121 : vector<32x64xf32>
    %cst_38 = arith.constant 1.000000e+00 : f32
    %123 = vector.broadcast %cst_38 : f32 to vector<32x64xf32>
    %124 = arith.addf %123, %122 : vector<32x64xf32>
    %125 = arith.mulf %114, %124 : vector<32x64xf32>
    %126 = arith.truncf %125 : vector<32x64xf32> to vector<32x64xbf16>
    %c0_39 = arith.constant 0 : index
    %c0_40 = arith.constant 0 : index
    %c0_41 = arith.constant 0 : index
    %127 = vector.load %arg9[%c0_39, %c0_40, %c0_41] : memref<1x64x32xbf16, #tpu.memory_space<vmem>>, vector<1x64x32xbf16>
    %128 = vector.shape_cast %127 : vector<1x64x32xbf16> to vector<64x32xbf16>
    %cst_42 = arith.constant dense<0.000000e+00> : vector<32x32xf32>
    %129 = tpu.matmul %126, %128, %cst_42 {dimension_numbers = #tpu.dot_dimension_numbers<[1], [0], [0], [1], [0, 0, 1, 1], [], []>} : vector<32x64xbf16>, vector<64x32xbf16>, vector<32x32xf32> -> vector<32x32xf32>
    %130 = vector.broadcast %11 : vector<1x32xf32> to vector<32x32xf32>
    %131 = arith.addf %129, %130 : vector<32x32xf32>
    %132 = arith.addf %106, %131 : vector<32x32xf32>
    %cst_43 = arith.constant dense<0.000000e+00> : vector<32xf32>
    %133 = vector.multi_reduction <add>, %132, %cst_43 [1] : vector<32x32xf32> to vector<32xf32>
    %134 = vector.shape_cast %133 : vector<32xf32> to vector<32x1xf32>
    %cst_44 = arith.constant 3.200000e+01 : f32
    %135 = vector.broadcast %cst_44 : f32 to vector<32x1xf32>
    %136 = arith.divf %134, %135 : vector<32x1xf32>
    %137 = vector.broadcast %136 : vector<32x1xf32> to vector<32x32xf32>
    %138 = arith.subf %132, %137 : vector<32x32xf32>
    %139 = arith.mulf %138, %138 : vector<32x32xf32>
    %cst_45 = arith.constant dense<0.000000e+00> : vector<32xf32>
    %140 = vector.multi_reduction <add>, %139, %cst_45 [1] : vector<32x32xf32> to vector<32xf32>
    %141 = vector.shape_cast %140 : vector<32xf32> to vector<32x1xf32>
    %cst_46 = arith.constant 3.200000e+01 : f32
    %142 = vector.broadcast %cst_46 : f32 to vector<32x1xf32>
    %143 = arith.divf %141, %142 : vector<32x1xf32>
    %144 = vector.broadcast %136 : vector<32x1xf32> to vector<32x32xf32>
    %145 = arith.subf %132, %144 : vector<32x32xf32>
    %cst_47 = arith.constant 9.99999996E-13 : f32
    %146 = vector.broadcast %cst_47 : f32 to vector<32x1xf32>
    %147 = arith.addf %143, %146 : vector<32x1xf32>
    %148 = math.rsqrt %147 : vector<32x1xf32>
    %149 = vector.broadcast %148 : vector<32x1xf32> to vector<32x32xf32>
    %150 = arith.mulf %145, %149 : vector<32x32xf32>
    %151 = vector.broadcast %12 : vector<1x32xf32> to vector<32x32xf32>
    %152 = arith.mulf %150, %151 : vector<32x32xf32>
    %153 = vector.broadcast %13 : vector<1x32xf32> to vector<32x32xf32>
    %154 = arith.addf %152, %153 : vector<32x32xf32>
    %c0_48 = arith.constant 0 : index
    %c0_49 = arith.constant 0 : index
    %155 = vector.load %arg12[%c0_48, %c0_49] : memref<32x32xf32, #tpu.memory_space<vmem>>, vector<32x32xf32>
    tpu.vector_store %arg12[%c0_48, %c0_49], %154 {strides = array<i32>} : memref<32x32xf32, #tpu.memory_space<vmem>>, vector<32x32xf32>,
    %c1_i32 = arith.constant 1 : i32
    %156 = arith.cmpi eq, %arg0, %c1_i32 : i32
    %157 = arith.extui %156 : i1 to i32
    %c0_i32_50 = arith.constant 0 : i32
    %158 = arith.cmpi ne, %157, %c0_i32_50 : i32
    scf.if %158 {
      %159 = vector.shape_cast %154 : vector<32x32xf32> to vector<4x8x32xf32>
      %c0_51 = arith.constant 0 : index
      %c0_52 = arith.constant 0 : index
      %160 = vector.load %arg3[%c0_51, %c0_52] : memref<4x8xf32, #tpu.memory_space<vmem>>, vector<4x8xf32>
      %161 = vector.shape_cast %160 : vector<4x8xf32> to vector<4x8x1xf32>
      %162 = vector.broadcast %161 : vector<4x8x1xf32> to vector<4x8x32xf32>
      %163 = arith.mulf %159, %162 : vector<4x8x32xf32>
      %cst_53 = arith.constant dense<0.000000e+00> : vector<4x32xf32>
      %164 = vector.multi_reduction <add>, %163, %cst_53 [1] : vector<4x8x32xf32> to vector<4x32xf32>
      %165 = vector.extract_strided_slice %164 {offsets = [0, 0], sizes = [2, 32], strides = [1, 1]} : vector<4x32xf32> to vector<2x32xf32>
      %166 = vector.extract_strided_slice %164 {offsets = [2, 0], sizes = [2, 32], strides = [1, 1]} : vector<4x32xf32> to vector<2x32xf32>
      %167 = arith.mulf %165, %166 : vector<2x32xf32>
      %cst_54 = arith.constant dense<0.000000e+00> : vector<2xf32>
      %168 = vector.multi_reduction <add>, %167, %cst_54 [1] : vector<2x32xf32> to vector<2xf32>
      %169 = vector.shape_cast %168 : vector<2xf32> to vector<2x1xf32>
      %170 = arith.mulf %165, %165 : vector<2x32xf32>
      %cst_55 = arith.constant dense<0.000000e+00> : vector<2xf32>
      %171 = vector.multi_reduction <add>, %170, %cst_55 [1] : vector<2x32xf32> to vector<2xf32>
      %172 = vector.shape_cast %171 : vector<2xf32> to vector<2x1xf32>
      %173 = math.sqrt %172 : vector<2x1xf32>
      %174 = arith.mulf %166, %166 : vector<2x32xf32>
      %cst_56 = arith.constant dense<0.000000e+00> : vector<2xf32>
      %175 = vector.multi_reduction <add>, %174, %cst_56 [1] : vector<2x32xf32> to vector<2xf32>
      %176 = vector.shape_cast %175 : vector<2xf32> to vector<2x1xf32>
      %177 = math.sqrt %176 : vector<2x1xf32>
      %cst_57 = arith.constant 9.99999993E-9 : f32
      %178 = vector.broadcast %cst_57 : f32 to vector<2x1xf32>
      %179 = arith.maximumf %173, %178 : vector<2x1xf32>
      %cst_58 = arith.constant 9.99999993E-9 : f32
      %180 = vector.broadcast %cst_58 : f32 to vector<2x1xf32>
      %181 = arith.maximumf %177, %180 : vector<2x1xf32>
      %182 = arith.mulf %179, %181 : vector<2x1xf32>
      %183 = arith.divf %169, %182 : vector<2x1xf32>
      %c0_59 = arith.constant 0 : index
      %c0_60 = arith.constant 0 : index
      %184 = vector.load %arg4[%c0_59, %c0_60] : memref<2x1xf32, #tpu.memory_space<vmem>>, vector<2x1xf32>
      %185 = arith.subf %183, %184 : vector<2x1xf32>
      %186 = arith.mulf %185, %185 : vector<2x1xf32>
      %187 = vector.shape_cast %186 : vector<2x1xf32> to vector<1x2x1xf32>
      %cst_61 = arith.constant dense<0.000000e+00> : vector<1xf32>
      %188 = vector.multi_reduction <add>, %187, %cst_61 [1, 2] : vector<1x2x1xf32> to vector<1xf32>
      %189 = vector.shape_cast %188 : vector<1xf32> to vector<1x1x1xf32>
      %190 = vector.extract %189[0, 0, 0] : f32 from vector<1x1x1xf32>
      %191 = vector.broadcast %190 : f32 to vector<1x1xf32>
      %cst_62 = arith.constant 5.000000e-01 : f32
      %192 = vector.broadcast %cst_62 : f32 to vector<1x1xf32>
      %193 = arith.mulf %191, %192 : vector<1x1xf32>
      %c0_63 = arith.constant 0 : index
      %c0_64 = arith.constant 0 : index
      %194 = vector.load %arg11[%c0_63, %c0_64] : memref<1x1xf32, #tpu.memory_space<vmem>>, vector<1x1xf32>
      tpu.vector_store %arg11[%c0_63, %c0_64], %193 {strides = array<i32>} : memref<1x1xf32, #tpu.memory_space<vmem>>, vector<1x1xf32>,
    } else {
    }
    return
  }
  func.func @transform_0(%arg0: i32) -> (i32, i32, i32) {
    %c0_i32 = arith.constant 0 : i32
    %c0_i32_0 = arith.constant 0 : i32
    %c0_i32_1 = arith.constant 0 : i32
    %c0_i32_2 = arith.constant 0 : i32
    return %c0_i32, %c0_i32_0, %c0_i32_1 : i32, i32, i32
  }
  func.func @transform_1(%arg0: i32) -> (i32, i32, i32) {
    %c0_i32 = arith.constant 0 : i32
    %c0_i32_0 = arith.constant 0 : i32
    %c0_i32_1 = arith.constant 0 : i32
    %c0_i32_2 = arith.constant 0 : i32
    return %c0_i32, %c0_i32_0, %c0_i32_1 : i32, i32, i32
  }
  func.func @transform_2(%arg0: i32) -> (i32, i32) {
    %c0_i32 = arith.constant 0 : i32
    %c0_i32_0 = arith.constant 0 : i32
    %c0_i32_1 = arith.constant 0 : i32
    return %c0_i32, %c0_i32_0 : i32, i32
  }
  func.func @transform_3(%arg0: i32) -> (i32, i32) {
    %c0_i32 = arith.constant 0 : i32
    %c0_i32_0 = arith.constant 0 : i32
    %c0_i32_1 = arith.constant 0 : i32
    return %c0_i32, %c0_i32_0 : i32, i32
  }
  func.func @transform_4(%arg0: i32) -> (i32, i32) {
    %c0_i32 = arith.constant 0 : i32
    %c0_i32_0 = arith.constant 0 : i32
    %c0_i32_1 = arith.constant 0 : i32
    return %c0_i32, %c0_i32_0 : i32, i32
  }
  func.func @transform_5(%arg0: i32) -> (i32, i32, i32) {
    %c0_i32 = arith.constant 0 : i32
    %c0_i32_0 = arith.constant 0 : i32
    %c0_i32_1 = arith.constant 0 : i32
    return %arg0, %c0_i32, %c0_i32_0 : i32, i32, i32
  }
  func.func @transform_6(%arg0: i32) -> (i32, i32, i32) {
    %c0_i32 = arith.constant 0 : i32
    %c0_i32_0 = arith.constant 0 : i32
    %c0_i32_1 = arith.constant 0 : i32
    return %arg0, %c0_i32, %c0_i32_0 : i32, i32, i32
  }
  func.func @transform_7(%arg0: i32) -> (i32, i32, i32) {
    %c0_i32 = arith.constant 0 : i32
    %c0_i32_0 = arith.constant 0 : i32
    %c0_i32_1 = arith.constant 0 : i32
    return %arg0, %c0_i32, %c0_i32_0 : i32, i32, i32
  }
  func.func @transform_8(%arg0: i32) -> (i32, i32, i32) {
    %c0_i32 = arith.constant 0 : i32
    %c0_i32_0 = arith.constant 0 : i32
    %c0_i32_1 = arith.constant 0 : i32
    return %arg0, %c0_i32, %c0_i32_0 : i32, i32, i32
  }
  func.func @transform_9(%arg0: i32) -> (i32, i32, i32) {
    %c0_i32 = arith.constant 0 : i32
    %c0_i32_0 = arith.constant 0 : i32
    %c0_i32_1 = arith.constant 0 : i32
    return %arg0, %c0_i32, %c0_i32_0 : i32, i32, i32
  }
  func.func @transform_10(%arg0: i32) -> (i32, i32) {
    %c0_i32 = arith.constant 0 : i32
    %c0_i32_0 = arith.constant 0 : i32
    %c0_i32_1 = arith.constant 0 : i32
    return %c0_i32, %c0_i32_0 : i32, i32
  }
}

</mosaic_0001>

<llo_original>
// kernel: sbert_forward.1
$region0: #{sbert_forward.1}
  #allocation0 [shape = 'u32[]', space=smem, size = 0x4, offset = 0x4, fixed_abs, tag = 'smem constant byte address 0x4 - core index']
  #allocation1 [shape = 'u32[144,128]{1,0:T(1,128)}', space=vmem, size = 0x12000, scoped, tag = 'internal scratch']
  #allocation2 [shape = 'f32[32,32]{1,0:T(8,128)}', space=vmem, size = 0x4000, scoped, tag = 'scratch operand']
  %s0 = inlined_call_operand.vmem [shape: f32[4,8,32], index: 0, kind: input, shape index: {}]
  %s1 = inlined_call_operand.vmem [shape: f32[4,1,8], index: 1, kind: input, shape index: {}]
  %s2 = inlined_call_operand.vmem [shape: f32[4,8], index: 2, kind: input, shape index: {}]
  %s3 = inlined_call_operand.vmem [shape: f32[2,1], index: 3, kind: input, shape index: {}]
  %s4 = inlined_call_operand.vmem [shape: f32[2,32], index: 4, kind: input, shape index: {}]
  %s5 = inlined_call_operand.vmem [shape: bf16[2,32,96], index: 5, kind: input, shape index: {}]
  %s6 = inlined_call_operand.vmem [shape: bf16[2,32,32], index: 6, kind: input, shape index: {}]
  %s7 = inlined_call_operand.vmem [shape: bf16[2,32,64], index: 7, kind: input, shape index: {}]
  %s8 = inlined_call_operand.vmem [shape: bf16[2,64,32], index: 8, kind: input, shape index: {}]
  %s9 = inlined_call_operand.vmem [shape: f32[2,8,96], index: 9, kind: input, shape index: {}]
  %s10 = inlined_call_operand.hbm [shape: f32[1,1], index: 10, kind: output, shape index: {}]
  %s11 = sld [smem:[#allocation0]]
  $region81: #{sbert_forward.1} parent=0
    _
  %s13 = ssub.s32 1, %s11
  %s14 = scalar_select 0, %s13, %s11
  $region1: #{sbert_forward.1} parent=0
    #allocation3 [shape = 'u8[512]{0}', space=vmem, size = 0x400, scoped, tag = 'output window, operand 0, single buffered']
    #allocation4 [shape = 's32[2]{0}', space=sflag, size = 0x8, scoped, tag = 'scoped memory for sbert_forward.1']
    %15 = vsyncpa [#allocation4], 0
    loop: start=0, step=1, limit=4
    $region2: #{sbert_forward.1} parent=1 // loop_pre_header
      _
    $region3: #{sbert_forward.1} parent=1 // loop_header
      %s17 = sphi 0, %s21
      %p18 = scmp.ge.s32.totalorder %s17, 4
      %s25 = sphi 0, %s25
      %s27 = sphi 0, %s25
      %s28 = sphi 0, %s27
      %s42 = sphi 0, %s28
      %s46 = sphi 0, %s46
      %s48 = sphi 0, %s46
      %s49 = sphi 0, %s48
      %s63 = sphi 0, %s49
      %s67 = sphi 0, %s67
      %s69 = sphi 0, %s67
      %s70 = sphi 0, %s69
      %s84 = sphi 0, %s70
      %s88 = sphi 0, %s88
      %s90 = sphi 0, %s88
      %s91 = sphi 0, %s90
      %s105 = sphi 0, %s91
      %s109 = sphi 0, %s109
      %s111 = sphi 0, %s109
      %s112 = sphi 0, %s111
      %s126 = sphi 0, %s112
      %s132 = sphi 0, %s134
      %s135 = sphi 0, %s132
      %s136 = sphi 0, %s135
      %s152 = sphi 0, %s136
      %s158 = sphi 0, %s160
      %s161 = sphi 0, %s158
      %s162 = sphi 0, %s161
      %s178 = sphi 0, %s162
      %s184 = sphi 0, %s186
      %s187 = sphi 0, %s184
      %s188 = sphi 0, %s187
      %s204 = sphi 0, %s188
      %s210 = sphi 0, %s212
      %s213 = sphi 0, %s210
      %s214 = sphi 0, %s213
      %s230 = sphi 0, %s214
      %s236 = sphi 0, %s238
      %s239 = sphi 0, %s236
      %s240 = sphi 0, %s239
      %s256 = sphi 0, %s240
      %s260 = sphi 0, %s260
      %s262 = sphi 0, %s260
      %s263 = sphi 0, %s262
      %s277 = sphi 0, %s263
    $region4: #{sbert_forward.1} parent=1 // loop_header_branch
      %20 = sbr.rel (%p18) target = $region8
    $region5: #{sbert_forward.1} parent=1 // loop_body
      %s22 = ssub.s32 %s17, 1
      %s23 = ssub.s32 %s17, 2
      %s24 = sadd.s32 %s17, 1
      %s26 = sadd.s32 %s25, 1
      %p29 = scmp.eq.s32.totalorder %s17, 1
      %p30 = scmp.ne.s32.totalorder %s25, %s27
      %p31 = scmp.eq.s32.totalorder %s17, 0
      %p32 = por %p30, %p31
      %p33 = scmp.ne.s32.totalorder %s25, %s27
      %p34 = scmp.eq.s32.totalorder %s22, 1
      %p35 = por %p33, %p34
      %p36 = scmp.ne.s32.totalorder %s27, %s28
      %p37 = scmp.eq.s32.totalorder %s22, 0
      %p38 = por %p36, %p37
      %p39 = scmp.ne.s32.totalorder %s27, %s28
      %p40 = scmp.eq.s32.totalorder %s23, 1
      %p41 = por %p39, %p40
      %p43 = scmp.ne.s32.totalorder %s28, %s42
      %p44 = scmp.eq.s32.totalorder %s23, 0
      %p45 = por %p43, %p44
      %s47 = sadd.s32 %s46, 1
      %p50 = scmp.eq.s32.totalorder %s17, 1
      %p51 = scmp.ne.s32.totalorder %s46, %s48
      %p52 = scmp.eq.s32.totalorder %s17, 0
      %p53 = por %p51, %p52
      %p54 = scmp.ne.s32.totalorder %s46, %s48
      %p55 = scmp.eq.s32.totalorder %s22, 1
      %p56 = por %p54, %p55
      %p57 = scmp.ne.s32.totalorder %s48, %s49
      %p58 = scmp.eq.s32.totalorder %s22, 0
      %p59 = por %p57, %p58
      %p60 = scmp.ne.s32.totalorder %s48, %s49
      %p61 = scmp.eq.s32.totalorder %s23, 1
      %p62 = por %p60, %p61
      %p64 = scmp.ne.s32.totalorder %s49, %s63
      %p65 = scmp.eq.s32.totalorder %s23, 0
      %p66 = por %p64, %p65
      %s68 = sadd.s32 %s67, 1
      %p71 = scmp.eq.s32.totalorder %s17, 1
      %p72 = scmp.ne.s32.totalorder %s67, %s69
      %p73 = scmp.eq.s32.totalorder %s17, 0
      %p74 = por %p72, %p73
      %p75 = scmp.ne.s32.totalorder %s67, %s69
      %p76 = scmp.eq.s32.totalorder %s22, 1
      %p77 = por %p75, %p76
      %p78 = scmp.ne.s32.totalorder %s69, %s70
      %p79 = scmp.eq.s32.totalorder %s22, 0
      %p80 = por %p78, %p79
      %p81 = scmp.ne.s32.totalorder %s69, %s70
      %p82 = scmp.eq.s32.totalorder %s23, 1
      %p83 = por %p81, %p82
      %p85 = scmp.ne.s32.totalorder %s70, %s84
      %p86 = scmp.eq.s32.totalorder %s23, 0
      %p87 = por %p85, %p86
      %s89 = sadd.s32 %s88, 1
      %p92 = scmp.eq.s32.totalorder %s17, 1
      %p93 = scmp.ne.s32.totalorder %s88, %s90
      %p94 = scmp.eq.s32.totalorder %s17, 0
      %p95 = por %p93, %p94
      %p96 = scmp.ne.s32.totalorder %s88, %s90
      %p97 = scmp.eq.s32.totalorder %s22, 1
      %p98 = por %p96, %p97
      %p99 = scmp.ne.s32.totalorder %s90, %s91
      %p100 = scmp.eq.s32.totalorder %s22, 0
      %p101 = por %p99, %p100
      %p102 = scmp.ne.s32.totalorder %s90, %s91
      %p103 = scmp.eq.s32.totalorder %s23, 1
      %p104 = por %p102, %p103
      %p106 = scmp.ne.s32.totalorder %s91, %s105
      %p107 = scmp.eq.s32.totalorder %s23, 0
      %p108 = por %p106, %p107
      %s110 = sadd.s32 %s109, 1
      %p113 = scmp.eq.s32.totalorder %s17, 1
      %p114 = scmp.ne.s32.totalorder %s109, %s111
      %p115 = scmp.eq.s32.totalorder %s17, 0
      %p116 = por %p114, %p115
      %p117 = scmp.ne.s32.totalorder %s109, %s111
      %p118 = scmp.eq.s32.totalorder %s22, 1
      %p119 = por %p117, %p118
      %p120 = scmp.ne.s32.totalorder %s111, %s112
      %p121 = scmp.eq.s32.totalorder %s22, 0
      %p122 = por %p120, %p121
      %p123 = scmp.ne.s32.totalorder %s111, %s112
      %p124 = scmp.eq.s32.totalorder %s23, 1
      %p125 = por %p123, %p124
      %p127 = scmp.ne.s32.totalorder %s112, %s126
      %p128 = scmp.eq.s32.totalorder %s23, 0
      %p129 = por %p127, %p128
      %s130 = ssub.s32 %s17, %s24
      %p131 = scmp.eq.s32.totalorder %s130, 0
      %s133 = sadd.s32 %s132, 1
      %s134 = scalar_select %p131, %s132, %s133
      %p137 = pneg %p131
      %p138 = scmp.eq.s32.totalorder %s17, 1
      %p139 = por %p137, %p138
      %p140 = scmp.ne.s32.totalorder %s132, %s135
      %p141 = scmp.eq.s32.totalorder %s17, 0
      %p142 = por %p140, %p141
      %p143 = scmp.ne.s32.totalorder %s132, %s135
      %p144 = scmp.eq.s32.totalorder %s22, 1
      %p145 = por %p143, %p144
      %p146 = scmp.ne.s32.totalorder %s135, %s136
      %p147 = scmp.eq.s32.totalorder %s22, 0
      %p148 = por %p146, %p147
      %p149 = scmp.ne.s32.totalorder %s135, %s136
      %p150 = scmp.eq.s32.totalorder %s23, 1
      %p151 = por %p149, %p150
      %p153 = scmp.ne.s32.totalorder %s136, %s152
      %p154 = scmp.eq.s32.totalorder %s23, 0
      %p155 = por %p153, %p154
      %s156 = ssub.s32 %s17, %s24
      %p157 = scmp.eq.s32.totalorder %s156, 0
      %s159 = sadd.s32 %s158, 1
      %s160 = scalar_select %p157, %s158, %s159
      %p163 = pneg %p157
      %p164 = scmp.eq.s32.totalorder %s17, 1
      %p165 = por %p163, %p164
      %p166 = scmp.ne.s32.totalorder %s158, %s161
      %p167 = scmp.eq.s32.totalorder %s17, 0
      %p168 = por %p166, %p167
      %p169 = scmp.ne.s32.totalorder %s158, %s161
      %p170 = scmp.eq.s32.totalorder %s22, 1
      %p171 = por %p169, %p170
      %p172 = scmp.ne.s32.totalorder %s161, %s162
      %p173 = scmp.eq.s32.totalorder %s22, 0
      %p174 = por %p172, %p173
      %p175 = scmp.ne.s32.totalorder %s161, %s162
      %p176 = scmp.eq.s32.totalorder %s23, 1
      %p177 = por %p175, %p176
      %p179 = scmp.ne.s32.totalorder %s162, %s178
      %p180 = scmp.eq.s32.totalorder %s23, 0
      %p181 = por %p179, %p180
      %s182 = ssub.s32 %s17, %s24
      %p183 = scmp.eq.s32.totalorder %s182, 0
      %s185 = sadd.s32 %s184, 1
      %s186 = scalar_select %p183, %s184, %s185
      %p189 = pneg %p183
      %p190 = scmp.eq.s32.totalorder %s17, 1
      %p191 = por %p189, %p190
      %p192 = scmp.ne.s32.totalorder %s184, %s187
      %p193 = scmp.eq.s32.totalorder %s17, 0
      %p194 = por %p192, %p193
      %p195 = scmp.ne.s32.totalorder %s184, %s187
      %p196 = scmp.eq.s32.totalorder %s22, 1
      %p197 = por %p195, %p196
      %p198 = scmp.ne.s32.totalorder %s187, %s188
      %p199 = scmp.eq.s32.totalorder %s22, 0
      %p200 = por %p198, %p199
      %p201 = scmp.ne.s32.totalorder %s187, %s188
      %p202 = scmp.eq.s32.totalorder %s23, 1
      %p203 = por %p201, %p202
      %p205 = scmp.ne.s32.totalorder %s188, %s204
      %p206 = scmp.eq.s32.totalorder %s23, 0
      %p207 = por %p205, %p206
      %s208 = ssub.s32 %s17, %s24
      %p209 = scmp.eq.s32.totalorder %s208, 0
      %s211 = sadd.s32 %s210, 1
      %s212 = scalar_select %p209, %s210, %s211
      %p215 = pneg %p209
      %p216 = scmp.eq.s32.totalorder %s17, 1
      %p217 = por %p215, %p216
      %p218 = scmp.ne.s32.totalorder %s210, %s213
      %p219 = scmp.eq.s32.totalorder %s17, 0
      %p220 = por %p218, %p219
      %p221 = scmp.ne.s32.totalorder %s210, %s213
      %p222 = scmp.eq.s32.totalorder %s22, 1
      %p223 = por %p221, %p222
      %p224 = scmp.ne.s32.totalorder %s213, %s214
      %p225 = scmp.eq.s32.totalorder %s22, 0
      %p226 = por %p224, %p225
      %p227 = scmp.ne.s32.totalorder %s213, %s214
      %p228 = scmp.eq.s32.totalorder %s23, 1
      %p229 = por %p227, %p228
      %p231 = scmp.ne.s32.totalorder %s214, %s230
      %p232 = scmp.eq.s32.totalorder %s23, 0
      %p233 = por %p231, %p232
      %s234 = ssub.s32 %s17, %s24
      %p235 = scmp.eq.s32.totalorder %s234, 0
      %s237 = sadd.s32 %s236, 1
      %s238 = scalar_select %p235, %s236, %s237
      %p241 = pneg %p235
      %p242 = scmp.eq.s32.totalorder %s17, 1
      %p243 = por %p241, %p242
      %p244 = scmp.ne.s32.totalorder %s236, %s239
      %p245 = scmp.eq.s32.totalorder %s17, 0
      %p246 = por %p244, %p245
      %p247 = scmp.ne.s32.totalorder %s236, %s239
      %p248 = scmp.eq.s32.totalorder %s22, 1
      %p249 = por %p247, %p248
      %p250 = scmp.ne.s32.totalorder %s239, %s240
      %p251 = scmp.eq.s32.totalorder %s22, 0
      %p252 = por %p250, %p251
      %p253 = scmp.ne.s32.totalorder %s239, %s240
      %p254 = scmp.eq.s32.totalorder %s23, 1
      %p255 = por %p253, %p254
      %p257 = scmp.ne.s32.totalorder %s240, %s256
      %p258 = scmp.eq.s32.totalorder %s23, 0
      %p259 = por %p257, %p258
      %s261 = sadd.s32 %s260, 1
      %p264 = scmp.eq.s32.totalorder %s17, 1
      %p265 = scmp.ne.s32.totalorder %s260, %s262
      %p266 = scmp.eq.s32.totalorder %s17, 0
      %p267 = por %p265, %p266
      %p268 = scmp.ne.s32.totalorder %s260, %s262
      %p269 = scmp.eq.s32.totalorder %s22, 1
      %p270 = por %p268, %p269
      %p271 = scmp.ne.s32.totalorder %s262, %s263
      %p272 = scmp.eq.s32.totalorder %s22, 0
      %p273 = por %p271, %p272
      %p274 = scmp.ne.s32.totalorder %s262, %s263
      %p275 = scmp.eq.s32.totalorder %s23, 1
      %p276 = por %p274, %p275
      %p278 = scmp.ne.s32.totalorder %s263, %s277
      %p279 = scmp.eq.s32.totalorder %s23, 0
      %p280 = por %p278, %p279
      %p281 = scmp.le.s32.totalorder 1, %s17
      %p282 = scmp.lt.s32.totalorder %s17, 3
      %p283 = pnand %p281, %p282
      %p284 = pneg %p283
      // Predicated region
      $region9: #{sbert_forward.1} parent=5 // pred_check
        _
      $region10: #{sbert_forward.1} parent=5 // pred_check_branch
        %286 = sbr.rel (%p283) target = $region12
      $region11: #{sbert_forward.1} parent=5 // pred_region
        %s287 = ssub.s32 %s17, 1
        // Predicated region
        $region13: #{sbert_forward.1} parent=11 // pred_check
          %p288 = pneg %p38
        $region14: #{sbert_forward.1} parent=11 // pred_check_branch
          %290 = sbr.rel (%p288) target = $region16
        $region15: #{sbert_forward.1} parent=11 // pred_region
          _
        $region16: #{sbert_forward.1} parent=11 // pred_fallthru
          _
        // Predicated region
        $region17: #{sbert_forward.1} parent=11 // pred_check
          %p291 = pneg %p59
        $region18: #{sbert_forward.1} parent=11 // pred_check_branch
          %293 = sbr.rel (%p291) target = $region20
        $region19: #{sbert_forward.1} parent=11 // pred_region
          _
        $region20: #{sbert_forward.1} parent=11 // pred_fallthru
          _
        // Predicated region
        $region21: #{sbert_forward.1} parent=11 // pred_check
          %p294 = pneg %p80
        $region22: #{sbert_forward.1} parent=11 // pred_check_branch
          %296 = sbr.rel (%p294) target = $region24
        $region23: #{sbert_forward.1} parent=11 // pred_region
          _
        $region24: #{sbert_forward.1} parent=11 // pred_fallthru
          _
        // Predicated region
        $region25: #{sbert_forward.1} parent=11 // pred_check
          %p297 = pneg %p101
        $region26: #{sbert_forward.1} parent=11 // pred_check_branch
          %299 = sbr.rel (%p297) target = $region28
        $region27: #{sbert_forward.1} parent=11 // pred_region
          _
        $region28: #{sbert_forward.1} parent=11 // pred_fallthru
          _
        // Predicated region
        $region29: #{sbert_forward.1} parent=11 // pred_check
          %p300 = pneg %p122
        $region30: #{sbert_forward.1} parent=11 // pred_check_branch
          %302 = sbr.rel (%p300) target = $region32
        $region31: #{sbert_forward.1} parent=11 // pred_region
          _
        $region32: #{sbert_forward.1} parent=11 // pred_fallthru
          _
      $region12: #{sbert_forward.1} parent=5 // pred_fallthru
        _
      %p303 = scmp.lt.s32.totalorder %s17, 2
      // Predicated region
      $region33: #{sbert_forward.1} parent=5 // pred_check
        %p304 = pneg %p303
      $region34: #{sbert_forward.1} parent=5 // pred_check_branch
        %306 = sbr.rel (%p304) target = $region36
      $region35: #{sbert_forward.1} parent=5 // pred_region
        // Predicated region
        $region37: #{sbert_forward.1} parent=35 // pred_check
          %p307 = pneg %p142
        $region38: #{sbert_forward.1} parent=35 // pred_check_branch
          %309 = sbr.rel (%p307) target = $region40
        $region39: #{sbert_forward.1} parent=35 // pred_region
          %p310 = scmp.lt.s32.totalorder %s17, 1
          %s311 = scalar_select %p310, %s17, 1
          %s312 = smul.addr %s311, 4
          %s313 = smul.addr %s312, 4
          %s314 = scalar_lea.vmem %s5, %s313
        $region40: #{sbert_forward.1} parent=35 // pred_fallthru
          _
        // Predicated region
        $region41: #{sbert_forward.1} parent=35 // pred_check
          %p315 = pneg %p168
        $region42: #{sbert_forward.1} parent=35 // pred_check_branch
          %317 = sbr.rel (%p315) target = $region44
        $region43: #{sbert_forward.1} parent=35 // pred_region
          %p318 = scmp.lt.s32.totalorder %s17, 1
          %s319 = scalar_select %p318, %s17, 1
          %s320 = smul.addr %s319, 4
          %s321 = smul.addr %s320, 4
          %s322 = scalar_lea.vmem %s6, %s321
        $region44: #{sbert_forward.1} parent=35 // pred_fallthru
          _
        // Predicated region
        $region45: #{sbert_forward.1} parent=35 // pred_check
          %p323 = pneg %p194
        $region46: #{sbert_forward.1} parent=35 // pred_check_branch
          %325 = sbr.rel (%p323) target = $region48
        $region47: #{sbert_forward.1} parent=35 // pred_region
          %p326 = scmp.lt.s32.totalorder %s17, 1
          %s327 = scalar_select %p326, %s17, 1
          %s328 = smul.addr %s327, 4
          %s329 = smul.addr %s328, 4
          %s330 = scalar_lea.vmem %s7, %s329
        $region48: #{sbert_forward.1} parent=35 // pred_fallthru
          _
        // Predicated region
        $region49: #{sbert_forward.1} parent=35 // pred_check
          %p331 = pneg %p220
        $region50: #{sbert_forward.1} parent=35 // pred_check_branch
          %333 = sbr.rel (%p331) target = $region52
        $region51: #{sbert_forward.1} parent=35 // pred_region
          %p334 = scmp.lt.s32.totalorder %s17, 1
          %s335 = scalar_select %p334, %s17, 1
          %s336 = smul.addr %s335, 8
          %s337 = smul.addr %s336, 4
          %s338 = scalar_lea.vmem %s8, %s337
        $region52: #{sbert_forward.1} parent=35 // pred_fallthru
          _
        // Predicated region
        $region53: #{sbert_forward.1} parent=35 // pred_check
          %p339 = pneg %p246
        $region54: #{sbert_forward.1} parent=35 // pred_check_branch
          %341 = sbr.rel (%p339) target = $region56
        $region55: #{sbert_forward.1} parent=35 // pred_region
          %p342 = scmp.lt.s32.totalorder %s17, 1
          %s343 = scalar_select %p342, %s17, 1
          %s344 = smul.addr %s343, 8
          %s345 = scalar_lea.vmem %s9, %s344
        $region56: #{sbert_forward.1} parent=35 // pred_fallthru
          _
      $region36: #{sbert_forward.1} parent=5 // pred_fallthru
        _
      %p346 = scmp.le.s32.totalorder 1, %s17
      %p347 = scmp.lt.s32.totalorder %s17, 3
      %p348 = pnand %p346, %p347
      %p349 = pneg %p348
      // Predicated region
      $region57: #{sbert_forward.1} parent=5 // pred_check
        _
      $region58: #{sbert_forward.1} parent=5 // pred_check_branch
        %351 = sbr.rel (%p348) target = $region60
      $region59: #{sbert_forward.1} parent=5 // pred_region
        %s352 = ssub.s32 %s17, 1
        %p353 = pneg %p38
        %p354 = pneg %p35
        %p355 = pneg %p59
        %p356 = pneg %p56
        %p357 = pneg %p80
        %p358 = pneg %p77
        %p359 = pneg %p101
        %p360 = pneg %p98
        %p361 = pneg %p122
        %p362 = pneg %p119
        %p363 = scmp.lt.s32.totalorder %s22, 1
        %s364 = scalar_select %p363, %s22, 1
        %s365 = smul.addr %s364, 4
        %s366 = smul.addr %s365, 4
        %s367 = scalar_lea.vmem %s5, %s366
        %p368 = pneg %p148
        %p369 = pneg %p145
        %p370 = scmp.lt.s32.totalorder %s22, 1
        %s371 = scalar_select %p370, %s22, 1
        %s372 = smul.addr %s371, 4
        %s373 = smul.addr %s372, 4
        %s374 = scalar_lea.vmem %s6, %s373
        %p375 = pneg %p174
        %p376 = pneg %p171
        %p377 = scmp.lt.s32.totalorder %s22, 1
        %s378 = scalar_select %p377, %s22, 1
        %s379 = smul.addr %s378, 4
        %s380 = smul.addr %s379, 4
        %s381 = scalar_lea.vmem %s7, %s380
        %p382 = pneg %p200
        %p383 = pneg %p197
        %p384 = scmp.lt.s32.totalorder %s22, 1
        %s385 = scalar_select %p384, %s22, 1
        %s386 = smul.addr %s385, 8
        %s387 = smul.addr %s386, 4
        %s388 = scalar_lea.vmem %s8, %s387
        %p389 = pneg %p226
        %p390 = pneg %p223
        %p391 = scmp.lt.s32.totalorder %s22, 1
        %s392 = scalar_select %p391, %s22, 1
        %s393 = smul.addr %s392, 8
        %s394 = scalar_lea.vmem %s9, %s393
        %p395 = pneg %p252
        %p396 = pneg %p249
        %p397 = pneg %p273
        %p398 = pneg %p270
        %p399 = scmp.lt.s32.totalorder %s22, 1
        %s400 = scalar_select %p399, %s22, 1
        %s401 = smul.addr %s400, 4
        %s402 = smul.addr %s401, 4
        %s403 = scalar_lea.vmem %s5, %s402
        %p404 = scmp.lt.s32.totalorder %s22, 1
        %s405 = scalar_select %p404, %s22, 1
        %s406 = smul.addr %s405, 4
        %s407 = smul.addr %s406, 4
        %s408 = scalar_lea.vmem %s6, %s407
        %p409 = scmp.lt.s32.totalorder %s22, 1
        %s410 = scalar_select %p409, %s22, 1
        %s411 = smul.addr %s410, 4
        %s412 = smul.addr %s411, 4
        %s413 = scalar_lea.vmem %s7, %s412
        %p414 = scmp.lt.s32.totalorder %s22, 1
        %s415 = scalar_select %p414, %s22, 1
        %s416 = smul.addr %s415, 8
        %s417 = smul.addr %s416, 4
        %s418 = scalar_lea.vmem %s8, %s417
        %p419 = scmp.lt.s32.totalorder %s22, 1
        %s420 = scalar_select %p419, %s22, 1
        %s421 = smul.addr %s420, 8
        %s422 = scalar_lea.vmem %s9, %s421
        %p424 = scmp.eq.s32.totalorder %s22, 0
        // Predicated region
        $region61: #{sbert_forward.1} parent=59 // pred_check
          %p425 = pneg %p424
        $region62: #{sbert_forward.1} parent=59 // pred_check_branch
          %427 = sbr.rel (%p425) target = $region64
        $region63: #{sbert_forward.1} parent=59 // pred_region
          %v428 = vld [vmem:[%s0] sm:$0xff]
          %v429 = vld [vmem:[%s0 + $0x8] sm:$0xff]
          %v430 = vld [vmem:[%s0 + $0x10] sm:$0xff]
          %v431 = vld [vmem:[%s0 + $0x18] sm:$0xff]
          %v432 = vld [vmem:[%s4] sm:$0x3]
          %vm433 = vcmask 261120
          %v434 = vsel %vm433, %v428, 0.0
          %435 = vadd.xlane.f32.xlu0 %v434
          %v436 = vpop.xlane.xlu0 %435
          %v437 = vsel %vm433, %v429, 0.0
          %438 = vadd.xlane.f32.xlu0 %v437
          %v439 = vpop.xlane.xlu0 %438
          %v440 = vsel %vm433, %v430, 0.0
          %441 = vadd.xlane.f32.xlu0 %v440
          %v442 = vpop.xlane.xlu0 %441
          %v443 = vsel %vm433, %v431, 0.0
          %444 = vadd.xlane.f32.xlu0 %v443
          %v445 = vpop.xlane.xlu0 %444
          %v446 = vrcp.pop 32.0
          %v447 = vmul.f32 %v436, %v446
          %v448 = vmul.f32 %v439, %v446
          %v449 = vmul.f32 %v442, %v446
          %v450 = vmul.f32 %v445, %v446
          %v451 = vsub.f32 %v428, %v447
          %v452 = vsub.f32 %v429, %v448
          %v453 = vsub.f32 %v430, %v449
          %v454 = vsub.f32 %v431, %v450
          %v455 = vmul.f32 %v451, %v451
          %v456 = vmul.f32 %v452, %v452
          %v457 = vmul.f32 %v453, %v453
          %v458 = vmul.f32 %v454, %v454
          %v459 = vsel %vm433, %v455, 0.0
          %460 = vadd.xlane.f32.xlu0 %v459
          %v461 = vpop.xlane.xlu0 %460
          %v462 = vsel %vm433, %v456, 0.0
          %463 = vadd.xlane.f32.xlu0 %v462
          %v464 = vpop.xlane.xlu0 %463
          %v465 = vsel %vm433, %v457, 0.0
          %466 = vadd.xlane.f32.xlu0 %v465
          %v467 = vpop.xlane.xlu0 %466
          %v468 = vsel %vm433, %v458, 0.0
          %469 = vadd.xlane.f32.xlu0 %v468
          %v470 = vpop.xlane.xlu0 %469
          %v471 = vmul.f32 %v461, %v446
          %v472 = vmul.f32 %v464, %v446
          %v473 = vmul.f32 %v467, %v446
          %v474 = vmul.f32 %v470, %v446
          %v475 = vadd.f32 %v471, 1e-12
          %v476 = vadd.f32 %v472, 1e-12
          %v477 = vadd.f32 %v473, 1e-12
          %v478 = vadd.f32 %v474, 1e-12
          %v479 = vrsqrt.pop %v475
          %v480 = vrsqrt.pop %v476
          %v481 = vrsqrt.pop %v477
          %v482 = vrsqrt.pop %v478
          %v483 = vmul.f32 %v451, %v479
          %v484 = vmul.f32 %v452, %v480
          %v485 = vmul.f32 %v453, %v481
          %v486 = vmul.f32 %v454, %v482
          %v487 = vlaneseq
          %v488 = vshrl.u32 %v487, 7
          %v489 = vsub.s32 0, %v488
          %v490 = vrot.slane %v432, %v489
          %v491 = vmul.f32 %v483, %v490
          %v492 = vmul.f32 %v484, %v490
          %v493 = vmul.f32 %v485, %v490
          %v494 = vmul.f32 %v486, %v490
          %v495 = vlaneseq
          %v496 = vshrl.u32 %v495, 7
          %v497 = vsub.s32 1, %v496
          %v498 = vrot.slane %v432, %v497
          %v499 = vadd.f32 %v491, %v498
          %v500 = vadd.f32 %v492, %v498
          %v501 = vadd.f32 %v493, %v498
          %v502 = vadd.f32 %v494, %v498
          %503 = vst.msk [vmem:[#allocation2] sm:$0xff] %vm433, %v499
          %504 = vst.msk [vmem:[#allocation2 + $0x8] sm:$0xff] %vm433, %v500
          %505 = vst.msk [vmem:[#allocation2 + $0x10] sm:$0xff] %vm433, %v501
          %506 = vst.msk [vmem:[#allocation2 + $0x18] sm:$0xff] %vm433, %v502
        $region64: #{sbert_forward.1} parent=59 // pred_fallthru
          _
        %v507 = vld [vmem:[#allocation2] sm:$0xff]
        %v508 = vld [vmem:[#allocation2 + $0x8] sm:$0xff]
        %v509 = vld [vmem:[#allocation2 + $0x10] sm:$0xff]
        %v510 = vld [vmem:[#allocation2 + $0x18] sm:$0xff]
        %v511 = vld [vmem:[%s422] sm:$0xff]
        %v512 = vpack.c.bf16 %v508, %v507
        %v513 = vpack.c.bf16 %v510, %v509
        %v514 = vld [vmem:[%s403] sm:$0xf]
        %v515 = vld [vmem:[%s403 + $0x4] sm:$0xf]
        %v516 = vld [vmem:[%s403 + $0x8] sm:$0xf]
        %v517 = vld [vmem:[%s403 + $0xc] sm:$0xf]
        %v518 = vlaneseq
        %v519 = vshrl.u32 %v518, 7
        %v520 = vsub.s32 0, %v519
        %v521 = vrot.slane %v511, %v520
        %v526 = vunpack.c.l.b16 %v514
        %v527 = vunpack.c.l.b16 %v515
        %v528 = vunpack.c.l.b16 %v516
        %v529 = vunpack.c.l.b16 %v517
        %v530 = vpack.c.b16 %v527, %v526
        %v531 = vpack.c.b16 %v529, %v528
        %vm534 = vcmask 261120
        %v536 = vsel %vm534, %v512, 0
        %v539 = vsel %vm534, %v513, 0
        %541 = vmatprep.subr.bf16.mxu0 0
        %542 = vmatpush1.bf16.msra.mxu0 %v530
        %543 = vmatprep.subr.bf16.mxu0 0
        %544 = vmatpush1.bf16.msra.mxu0 %v531
        %545 = vmatprep.subr.bf16.mxu0 0
        %546 = vmatpush1.bf16.msra.mxu0 0
        %547 = vmatprep.subr.bf16.mxu0 0
        %548 = vmatpush1.bf16.msra.mxu0 0
        %549 = vmatprep.subr.bf16.mxu0 0
        %550 = vmatpush1.bf16.msra.mxu0 0
        %551 = vmatprep.subr.bf16.mxu0 0
        %552 = vmatpush1.bf16.msra.mxu0 0
        %553 = vmatprep.subr.bf16.mxu0 0
        %554 = vmatpush1.bf16.msra.mxu0 0
        %555 = vmatprep.subr.bf16.mxu0 0
        %556 = vmatpush1.bf16.msra.mxu0 0
        %557 = vmatprep.subr.bf16.mxu0 0
        %558 = vmatpush1.bf16.msra.mxu0 0
        %559 = vmatprep.subr.bf16.mxu0 0
        %560 = vmatpush1.bf16.msra.mxu0 0
        %561 = vmatprep.subr.bf16.mxu0 0
        %562 = vmatpush1.bf16.msra.mxu0 0
        %563 = vmatprep.subr.bf16.mxu0 0
        %564 = vmatpush1.bf16.msra.mxu0 0
        %565 = vmatprep.subr.bf16.mxu0 0
        %566 = vmatpush1.bf16.msra.mxu0 0
        %567 = vmatprep.subr.bf16.mxu0 0
        %568 = vmatpush1.bf16.msra.mxu0 0
        %569 = vmatprep.subr.bf16.mxu0 0
        %570 = vmatpush1.bf16.msra.mxu0 0
        %571 = vmatprep.subr.bf16.mxu0 0
        %572 = vmatpush1.bf16.msra.mxu0 0
        %573 = vmatprep.mubr.bf16.mxu0 0
        %574 = vmatmul.mubr.bf16.gmra.mrb[0].mxu0 %v536
        %v575 = vpop.f32.mrb[0].mxu0
        %v576 = vadd.f32 %v521, %v575
        %v577 = vpop.f32.mrb[0].mxu0
        %v578 = vpop.f32.mrb[0].mxu0
        %v579 = vadd.f32 %v521, %v578
        %v580 = vpop.f32.mrb[0].mxu0
        %581 = vmatprep.mubr.bf16.mxu0 0
        %582 = vmatmul.mubr.bf16.gmra.mrb[0].mxu0 %v539
        %v583 = vpop.f32.mrb[0].mxu0
        %v584 = vadd.f32 %v521, %v583
        %v585 = vpop.f32.mrb[0].mxu0
        %v586 = vpop.f32.mrb[0].mxu0
        %v587 = vadd.f32 %v521, %v586
        %v588 = vpop.f32.mrb[0].mxu0
        %589 = vdwg.mxu0
        %v590 = vld [vmem:[%s1] sm:$0x1]
        %v591 = vld [vmem:[%s1 + $0x1] sm:$0x1]
        %v592 = vld [vmem:[%s1 + $0x2] sm:$0x1]
        %v593 = vld [vmem:[%s1 + $0x3] sm:$0x1]
        %v594 = vld [vmem:[%s408] sm:$0xf]
        %v595 = vld [vmem:[%s408 + $0x4] sm:$0xf]
        %v596 = vld [vmem:[%s408 + $0x8] sm:$0xf]
        %v597 = vld [vmem:[%s408 + $0xc] sm:$0xf]
        %v598 = vpack.c.bf16 %v576, %v576
        %v599 = vpack.c.bf16 %v579, %v579
        %v600 = vpack.c.bf16 %v584, %v584
        %v601 = vpack.c.bf16 %v587, %v587
        %603 = vrot.lane.b32.xlu0 %v598, 96
        %v604 = vpop.permute.xlu0 %603
        %vm605 = vcmask 130048
        %v607 = vsel %vm605, %v598, 0
        %v610 = vsel %vm605, %v604, 0
        %612 = vmatprep.subr.bf16.mxu0 0
        %613 = vmatpush1.bf16.xpose.msra.mxu0 %v610
        %614 = vmatprep.subr.bf16.mxu0 0
        %615 = vmatpush1.bf16.xpose.msra.mxu0 0
        %616 = vmatprep.subr.bf16.mxu0 0
        %617 = vmatpush1.bf16.xpose.msra.mxu0 0
        %618 = vmatprep.subr.bf16.mxu0 0
        %619 = vmatpush1.bf16.xpose.msra.mxu0 0
        %620 = vmatprep.subr.bf16.mxu0 0
        %621 = vmatpush1.bf16.xpose.msra.mxu0 0
        %622 = vmatprep.subr.bf16.mxu0 0
        %623 = vmatpush1.bf16.xpose.msra.mxu0 0
        %624 = vmatprep.subr.bf16.mxu0 0
        %625 = vmatpush1.bf16.xpose.msra.mxu0 0
        %626 = vmatprep.subr.bf16.mxu0 0
        %627 = vmatpush1.bf16.xpose.msra.mxu0 0
        %628 = vmatprep.subr.bf16.mxu0 0
        %629 = vmatpush1.bf16.xpose.msra.mxu0 0
        %630 = vmatprep.subr.bf16.mxu0 0
        %631 = vmatpush1.bf16.xpose.msra.mxu0 0
        %632 = vmatprep.subr.bf16.mxu0 0
        %633 = vmatpush1.bf16.xpose.msra.mxu0 0
        %634 = vmatprep.subr.bf16.mxu0 0
        %635 = vmatpush1.bf16.xpose.msra.mxu0 0
        %636 = vmatprep.subr.bf16.mxu0 0
        %637 = vmatpush1.bf16.xpose.msra.mxu0 0
        %638 = vmatprep.subr.bf16.mxu0 0
        %639 = vmatpush1.bf16.xpose.msra.mxu0 0
        %640 = vmatprep.subr.bf16.mxu0 0
        %641 = vmatpush1.bf16.xpose.msra.mxu0 0
        %642 = vmatprep.subr.bf16.mxu0 0
        %643 = vmatpush1.bf16.xpose.msra.mxu0 0
        %644 = vmatprep.mubr.bf16.mxu0 0
        %645 = vmatmul.mubr.bf16.gmra.mrb[0].mxu0 %v607
        %v646 = vpop.f32.mrb[0].mxu0
        %v647 = vadd.f32 0.0, %v646
        %v648 = vpop.f32.mrb[0].mxu0
        %v649 = vpop.f32.mrb[0].mxu0
        %v650 = vpop.f32.mrb[0].mxu0
        %651 = vdwg.mxu0
        %653 = vrot.lane.b32.xlu0 %v599, 96
        %v654 = vpop.permute.xlu0 %653
        %v656 = vsel %vm605, %v599, 0
        %v659 = vsel %vm605, %v654, 0
        %661 = vmatprep.subr.bf16.mxu0 0
        %662 = vmatpush1.bf16.xpose.msra.mxu0 %v659
        %663 = vmatprep.subr.bf16.mxu0 0
        %664 = vmatpush1.bf16.xpose.msra.mxu0 0
        %665 = vmatprep.subr.bf16.mxu0 0
        %666 = vmatpush1.bf16.xpose.msra.mxu0 0
        %667 = vmatprep.subr.bf16.mxu0 0
        %668 = vmatpush1.bf16.xpose.msra.mxu0 0
        %669 = vmatprep.subr.bf16.mxu0 0
        %670 = vmatpush1.bf16.xpose.msra.mxu0 0
        %671 = vmatprep.subr.bf16.mxu0 0
        %672 = vmatpush1.bf16.xpose.msra.mxu0 0
        %673 = vmatprep.subr.bf16.mxu0 0
        %674 = vmatpush1.bf16.xpose.msra.mxu0 0
        %675 = vmatprep.subr.bf16.mxu0 0
        %676 = vmatpush1.bf16.xpose.msra.mxu0 0
        %677 = vmatprep.subr.bf16.mxu0 0
        %678 = vmatpush1.bf16.xpose.msra.mxu0 0
        %679 = vmatprep.subr.bf16.mxu0 0
        %680 = vmatpush1.bf16.xpose.msra.mxu0 0
        %681 = vmatprep.subr.bf16.mxu0 0
        %682 = vmatpush1.bf16.xpose.msra.mxu0 0
        %683 = vmatprep.subr.bf16.mxu0 0
        %684 = vmatpush1.bf16.xpose.msra.mxu0 0
        %685 = vmatprep.subr.bf16.mxu0 0
        %686 = vmatpush1.bf16.xpose.msra.mxu0 0
        %687 = vmatprep.subr.bf16.mxu0 0
        %688 = vmatpush1.bf16.xpose.msra.mxu0 0
        %689 = vmatprep.subr.bf16.mxu0 0
        %690 = vmatpush1.bf16.xpose.msra.mxu0 0
        %691 = vmatprep.subr.bf16.mxu0 0
        %692 = vmatpush1.bf16.xpose.msra.mxu0 0
        %693 = vmatprep.mubr.bf16.mxu0 0
        %694 = vmatmul.mubr.bf16.gmra.mrb[0].mxu0 %v656
        %v695 = vpop.f32.mrb[0].mxu0
        %v696 = vadd.f32 0.0, %v695
        %v697 = vpop.f32.mrb[0].mxu0
        %v698 = vpop.f32.mrb[0].mxu0
        %v699 = vpop.f32.mrb[0].mxu0
        %700 = vdwg.mxu0
        %702 = vrot.lane.b32.xlu0 %v600, 96
        %v703 = vpop.permute.xlu0 %702
        %v705 = vsel %vm605, %v600, 0
        %v708 = vsel %vm605, %v703, 0
        %710 = vmatprep.subr.bf16.mxu0 0
        %711 = vmatpush1.bf16.xpose.msra.mxu0 %v708
        %712 = vmatprep.subr.bf16.mxu0 0
        %713 = vmatpush1.bf16.xpose.msra.mxu0 0
        %714 = vmatprep.subr.bf16.mxu0 0
        %715 = vmatpush1.bf16.xpose.msra.mxu0 0
        %716 = vmatprep.subr.bf16.mxu0 0
        %717 = vmatpush1.bf16.xpose.msra.mxu0 0
        %718 = vmatprep.subr.bf16.mxu0 0
        %719 = vmatpush1.bf16.xpose.msra.mxu0 0
        %720 = vmatprep.subr.bf16.mxu0 0
        %721 = vmatpush1.bf16.xpose.msra.mxu0 0
        %722 = vmatprep.subr.bf16.mxu0 0
        %723 = vmatpush1.bf16.xpose.msra.mxu0 0
        %724 = vmatprep.subr.bf16.mxu0 0
        %725 = vmatpush1.bf16.xpose.msra.mxu0 0
        %726 = vmatprep.subr.bf16.mxu0 0
        %727 = vmatpush1.bf16.xpose.msra.mxu0 0
        %728 = vmatprep.subr.bf16.mxu0 0
        %729 = vmatpush1.bf16.xpose.msra.mxu0 0
        %730 = vmatprep.subr.bf16.mxu0 0
        %731 = vmatpush1.bf16.xpose.msra.mxu0 0
        %732 = vmatprep.subr.bf16.mxu0 0
        %733 = vmatpush1.bf16.xpose.msra.mxu0 0
        %734 = vmatprep.subr.bf16.mxu0 0
        %735 = vmatpush1.bf16.xpose.msra.mxu0 0
        %736 = vmatprep.subr.bf16.mxu0 0
        %737 = vmatpush1.bf16.xpose.msra.mxu0 0
        %738 = vmatprep.subr.bf16.mxu0 0
        %739 = vmatpush1.bf16.xpose.msra.mxu0 0
        %740 = vmatprep.subr.bf16.mxu0 0
        %741 = vmatpush1.bf16.xpose.msra.mxu0 0
        %742 = vmatprep.mubr.bf16.mxu0 0
        %743 = vmatmul.mubr.bf16.gmra.mrb[0].mxu0 %v705
        %v744 = vpop.f32.mrb[0].mxu0
        %v745 = vadd.f32 0.0, %v744
        %v746 = vpop.f32.mrb[0].mxu0
        %v747 = vpop.f32.mrb[0].mxu0
        %v748 = vpop.f32.mrb[0].mxu0
        %749 = vdwg.mxu0
        %751 = vrot.lane.b32.xlu0 %v601, 96
        %v752 = vpop.permute.xlu0 %751
        %v754 = vsel %vm605, %v601, 0
        %v757 = vsel %vm605, %v752, 0
        %759 = vmatprep.subr.bf16.mxu0 0
        %760 = vmatpush1.bf16.xpose.msra.mxu0 %v757
        %761 = vmatprep.subr.bf16.mxu0 0
        %762 = vmatpush1.bf16.xpose.msra.mxu0 0
        %763 = vmatprep.subr.bf16.mxu0 0
        %764 = vmatpush1.bf16.xpose.msra.mxu0 0
        %765 = vmatprep.subr.bf16.mxu0 0
        %766 = vmatpush1.bf16.xpose.msra.mxu0 0
        %767 = vmatprep.subr.bf16.mxu0 0
        %768 = vmatpush1.bf16.xpose.msra.mxu0 0
        %769 = vmatprep.subr.bf16.mxu0 0
        %770 = vmatpush1.bf16.xpose.msra.mxu0 0
        %771 = vmatprep.subr.bf16.mxu0 0
        %772 = vmatpush1.bf16.xpose.msra.mxu0 0
        %773 = vmatprep.subr.bf16.mxu0 0
        %774 = vmatpush1.bf16.xpose.msra.mxu0 0
        %775 = vmatprep.subr.bf16.mxu0 0
        %776 = vmatpush1.bf16.xpose.msra.mxu0 0
        %777 = vmatprep.subr.bf16.mxu0 0
        %778 = vmatpush1.bf16.xpose.msra.mxu0 0
        %779 = vmatprep.subr.bf16.mxu0 0
        %780 = vmatpush1.bf16.xpose.msra.mxu0 0
        %781 = vmatprep.subr.bf16.mxu0 0
        %782 = vmatpush1.bf16.xpose.msra.mxu0 0
        %783 = vmatprep.subr.bf16.mxu0 0
        %784 = vmatpush1.bf16.xpose.msra.mxu0 0
        %785 = vmatprep.subr.bf16.mxu0 0
        %786 = vmatpush1.bf16.xpose.msra.mxu0 0
        %787 = vmatprep.subr.bf16.mxu0 0
        %788 = vmatpush1.bf16.xpose.msra.mxu0 0
        %789 = vmatprep.subr.bf16.mxu0 0
        %790 = vmatpush1.bf16.xpose.msra.mxu0 0
        %791 = vmatprep.mubr.bf16.mxu0 0
        %792 = vmatmul.mubr.bf16.gmra.mrb[0].mxu0 %v754
        %v793 = vpop.f32.mrb[0].mxu0
        %v794 = vadd.f32 0.0, %v793
        %v795 = vpop.f32.mrb[0].mxu0
        %v796 = vpop.f32.mrb[0].mxu0
        %v797 = vpop.f32.mrb[0].mxu0
        %798 = vdwg.mxu0
        %v799 = vmul.f32 %v647, 0.25
        %v800 = vmul.f32 %v696, 0.25
        %v801 = vmul.f32 %v745, 0.25
        %v802 = vmul.f32 %v794, 0.25
        %v807 = vlaneseq
        %v808 = vshrl.u32 %v807, 7
        %v809 = vsub.s32 0, %v808
        %v810 = vrot.slane %v590, %v809
        %v811 = vlaneseq
        %v812 = vshrl.u32 %v811, 7
        %v813 = vsub.s32 0, %v812
        %v814 = vrot.slane %v591, %v813
        %v815 = vlaneseq
        %v816 = vshrl.u32 %v815, 7
        %v817 = vsub.s32 0, %v816
        %v818 = vrot.slane %v592, %v817
        %v819 = vlaneseq
        %v820 = vshrl.u32 %v819, 7
        %v821 = vsub.s32 0, %v820
        %v822 = vrot.slane %v593, %v821
        %v827 = vadd.f32 %v799, %v810
        %v828 = vadd.f32 %v800, %v814
        %v829 = vadd.f32 %v801, %v818
        %v830 = vadd.f32 %v802, %v822
        %vm831 = vcmask 64512
        %v832 = vsel %vm831, %v827, -inf
        %833 = vmax.xlane.f32.xlu0 %v832
        %v834 = vpop.xlane.xlu0 %833
        %v835 = vsel %vm831, %v828, -inf
        %836 = vmax.xlane.f32.xlu0 %v835
        %v837 = vpop.xlane.xlu0 %836
        %v838 = vsel %vm831, %v829, -inf
        %839 = vmax.xlane.f32.xlu0 %v838
        %v840 = vpop.xlane.xlu0 %839
        %v841 = vsel %vm831, %v830, -inf
        %842 = vmax.xlane.f32.xlu0 %v841
        %v843 = vpop.xlane.xlu0 %842
        %v844 = vsub.f32 %v827, %v834
        %v845 = vsub.f32 %v828, %v837
        %v846 = vsub.f32 %v829, %v840
        %v847 = vsub.f32 %v830, %v843
        %v848 = vmul.f32 %v844, 1.442695
        %v849 = vpow.pop %v848
        %v850 = vmul.f32 %v845, 1.442695
        %v851 = vpow.pop %v850
        %v852 = vmul.f32 %v846, 1.442695
        %v853 = vpow.pop %v852
        %v854 = vmul.f32 %v847, 1.442695
        %v855 = vpow.pop %v854
        %v856 = vsel %vm831, %v849, 0.0
        %857 = vadd.xlane.f32.xlu0 %v856
        %v858 = vpop.xlane.xlu0 %857
        %v859 = vsel %vm831, %v851, 0.0
        %860 = vadd.xlane.f32.xlu0 %v859
        %v861 = vpop.xlane.xlu0 %860
        %v862 = vsel %vm831, %v853, 0.0
        %863 = vadd.xlane.f32.xlu0 %v862
        %v864 = vpop.xlane.xlu0 %863
        %v865 = vsel %vm831, %v855, 0.0
        %866 = vadd.xlane.f32.xlu0 %v865
        %v867 = vpop.xlane.xlu0 %866
        %v868 = vrcp.pop %v858
        %v869 = vmul.f32 %v849, %v868
        %v870 = vrcp.pop %v861
        %v871 = vmul.f32 %v851, %v870
        %v872 = vrcp.pop %v864
        %v873 = vmul.f32 %v853, %v872
        %v874 = vrcp.pop %v867
        %v875 = vmul.f32 %v855, %v874
        %v876 = vpack.c.bf16 %v869, %v869
        %v877 = vpack.c.bf16 %v871, %v871
        %v878 = vpack.c.bf16 %v873, %v873
        %v879 = vpack.c.bf16 %v875, %v875
        %880 = vrot.lane.b32.xlu0 %v598, 64
        %v881 = vpop.permute.xlu0 %880
        %v883 = vsel %vm831, %v876, 0
        %vm885 = vcmask 1043456
        %v887 = vsel %vm885, %v881, 0
        %889 = vmatprep.subr.bf16.mxu0 0
        %890 = vmatpush1.bf16.msra.mxu0 %v887
        %891 = vmatprep.subr.bf16.mxu0 0
        %892 = vmatpush1.bf16.msra.mxu0 0
        %893 = vmatprep.subr.bf16.mxu0 0
        %894 = vmatpush1.bf16.msra.mxu0 0
        %895 = vmatprep.subr.bf16.mxu0 0
        %896 = vmatpush1.bf16.msra.mxu0 0
        %897 = vmatprep.subr.bf16.mxu0 0
        %898 = vmatpush1.bf16.msra.mxu0 0
        %899 = vmatprep.subr.bf16.mxu0 0
        %900 = vmatpush1.bf16.msra.mxu0 0
        %901 = vmatprep.subr.bf16.mxu0 0
        %902 = vmatpush1.bf16.msra.mxu0 0
        %903 = vmatprep.subr.bf16.mxu0 0
        %904 = vmatpush1.bf16.msra.mxu0 0
        %905 = vmatprep.subr.bf16.mxu0 0
        %906 = vmatpush1.bf16.msra.mxu0 0
        %907 = vmatprep.subr.bf16.mxu0 0
        %908 = vmatpush1.bf16.msra.mxu0 0
        %909 = vmatprep.subr.bf16.mxu0 0
        %910 = vmatpush1.bf16.msra.mxu0 0
        %911 = vmatprep.subr.bf16.mxu0 0
        %912 = vmatpush1.bf16.msra.mxu0 0
        %913 = vmatprep.subr.bf16.mxu0 0
        %914 = vmatpush1.bf16.msra.mxu0 0
        %915 = vmatprep.subr.bf16.mxu0 0
        %916 = vmatpush1.bf16.msra.mxu0 0
        %917 = vmatprep.subr.bf16.mxu0 0
        %918 = vmatpush1.bf16.msra.mxu0 0
        %919 = vmatprep.subr.bf16.mxu0 0
        %920 = vmatpush1.bf16.msra.mxu0 0
        %921 = vmatprep.mubr.bf16.mxu0 0
        %922 = vmatmul.mubr.bf16.gmra.mrb[0].mxu0 %v883
        %v923 = vpop.f32.mrb[0].mxu0
        %v924 = vadd.f32 0.0, %v923
        %v925 = vpop.f32.mrb[0].mxu0
        %v926 = vpop.f32.mrb[0].mxu0
        %v927 = vpop.f32.mrb[0].mxu0
        %928 = vdwg.mxu0
        %929 = vrot.lane.b32.xlu0 %v599, 64
        %v930 = vpop.permute.xlu0 %929
        %v932 = vsel %vm831, %v877, 0
        %v935 = vsel %vm885, %v930, 0
        %937 = vmatprep.subr.bf16.mxu0 0
        %938 = vmatpush1.bf16.msra.mxu0 %v935
        %939 = vmatprep.subr.bf16.mxu0 0
        %940 = vmatpush1.bf16.msra.mxu0 0
        %941 = vmatprep.subr.bf16.mxu0 0
        %942 = vmatpush1.bf16.msra.mxu0 0
        %943 = vmatprep.subr.bf16.mxu0 0
        %944 = vmatpush1.bf16.msra.mxu0 0
        %945 = vmatprep.subr.bf16.mxu0 0
        %946 = vmatpush1.bf16.msra.mxu0 0
        %947 = vmatprep.subr.bf16.mxu0 0
        %948 = vmatpush1.bf16.msra.mxu0 0
        %949 = vmatprep.subr.bf16.mxu0 0
        %950 = vmatpush1.bf16.msra.mxu0 0
        %951 = vmatprep.subr.bf16.mxu0 0
        %952 = vmatpush1.bf16.msra.mxu0 0
        %953 = vmatprep.subr.bf16.mxu0 0
        %954 = vmatpush1.bf16.msra.mxu0 0
        %955 = vmatprep.subr.bf16.mxu0 0
        %956 = vmatpush1.bf16.msra.mxu0 0
        %957 = vmatprep.subr.bf16.mxu0 0
        %958 = vmatpush1.bf16.msra.mxu0 0
        %959 = vmatprep.subr.bf16.mxu0 0
        %960 = vmatpush1.bf16.msra.mxu0 0
        %961 = vmatprep.subr.bf16.mxu0 0
        %962 = vmatpush1.bf16.msra.mxu0 0
        %963 = vmatprep.subr.bf16.mxu0 0
        %964 = vmatpush1.bf16.msra.mxu0 0
        %965 = vmatprep.subr.bf16.mxu0 0
        %966 = vmatpush1.bf16.msra.mxu0 0
        %967 = vmatprep.subr.bf16.mxu0 0
        %968 = vmatpush1.bf16.msra.mxu0 0
        %969 = vmatprep.mubr.bf16.mxu0 0
        %970 = vmatmul.mubr.bf16.gmra.mrb[0].mxu0 %v932
        %v971 = vpop.f32.mrb[0].mxu0
        %v972 = vadd.f32 0.0, %v971
        %v973 = vpop.f32.mrb[0].mxu0
        %v974 = vpop.f32.mrb[0].mxu0
        %v975 = vpop.f32.mrb[0].mxu0
        %976 = vdwg.mxu0
        %977 = vrot.lane.b32.xlu0 %v600, 64
        %v978 = vpop.permute.xlu0 %977
        %v980 = vsel %vm831, %v878, 0
        %v983 = vsel %vm885, %v978, 0
        %985 = vmatprep.subr.bf16.mxu0 0
        %986 = vmatpush1.bf16.msra.mxu0 %v983
        %987 = vmatprep.subr.bf16.mxu0 0
        %988 = vmatpush1.bf16.msra.mxu0 0
        %989 = vmatprep.subr.bf16.mxu0 0
        %990 = vmatpush1.bf16.msra.mxu0 0
        %991 = vmatprep.subr.bf16.mxu0 0
        %992 = vmatpush1.bf16.msra.mxu0 0
        %993 = vmatprep.subr.bf16.mxu0 0
        %994 = vmatpush1.bf16.msra.mxu0 0
        %995 = vmatprep.subr.bf16.mxu0 0
        %996 = vmatpush1.bf16.msra.mxu0 0
        %997 = vmatprep.subr.bf16.mxu0 0
        %998 = vmatpush1.bf16.msra.mxu0 0
        %999 = vmatprep.subr.bf16.mxu0 0
        %1000 = vmatpush1.bf16.msra.mxu0 0
        %1001 = vmatprep.subr.bf16.mxu0 0
        %1002 = vmatpush1.bf16.msra.mxu0 0
        %1003 = vmatprep.subr.bf16.mxu0 0
        %1004 = vmatpush1.bf16.msra.mxu0 0
        %1005 = vmatprep.subr.bf16.mxu0 0
        %1006 = vmatpush1.bf16.msra.mxu0 0
        %1007 = vmatprep.subr.bf16.mxu0 0
        %1008 = vmatpush1.bf16.msra.mxu0 0
        %1009 = vmatprep.subr.bf16.mxu0 0
        %1010 = vmatpush1.bf16.msra.mxu0 0
        %1011 = vmatprep.subr.bf16.mxu0 0
        %1012 = vmatpush1.bf16.msra.mxu0 0
        %1013 = vmatprep.subr.bf16.mxu0 0
        %1014 = vmatpush1.bf16.msra.mxu0 0
        %1015 = vmatprep.subr.bf16.mxu0 0
        %1016 = vmatpush1.bf16.msra.mxu0 0
        %1017 = vmatprep.mubr.bf16.mxu0 0
        %1018 = vmatmul.mubr.bf16.gmra.mrb[0].mxu0 %v980
        %v1019 = vpop.f32.mrb[0].mxu0
        %v1020 = vadd.f32 0.0, %v1019
        %v1021 = vpop.f32.mrb[0].mxu0
        %v1022 = vpop.f32.mrb[0].mxu0
        %v1023 = vpop.f32.mrb[0].mxu0
        %1024 = vdwg.mxu0
        %1025 = vrot.lane.b32.xlu0 %v601, 64
        %v1026 = vpop.permute.xlu0 %1025
        %v1028 = vsel %vm831, %v879, 0
        %v1031 = vsel %vm885, %v1026, 0
        %1033 = vmatprep.subr.bf16.mxu0 0
        %1034 = vmatpush1.bf16.msra.mxu0 %v1031
        %1035 = vmatprep.subr.bf16.mxu0 0
        %1036 = vmatpush1.bf16.msra.mxu0 0
        %1037 = vmatprep.subr.bf16.mxu0 0
        %1038 = vmatpush1.bf16.msra.mxu0 0
        %1039 = vmatprep.subr.bf16.mxu0 0
        %1040 = vmatpush1.bf16.msra.mxu0 0
        %1041 = vmatprep.subr.bf16.mxu0 0
        %1042 = vmatpush1.bf16.msra.mxu0 0
        %1043 = vmatprep.subr.bf16.mxu0 0
        %1044 = vmatpush1.bf16.msra.mxu0 0
        %1045 = vmatprep.subr.bf16.mxu0 0
        %1046 = vmatpush1.bf16.msra.mxu0 0
        %1047 = vmatprep.subr.bf16.mxu0 0
        %1048 = vmatpush1.bf16.msra.mxu0 0
        %1049 = vmatprep.subr.bf16.mxu0 0
        %1050 = vmatpush1.bf16.msra.mxu0 0
        %1051 = vmatprep.subr.bf16.mxu0 0
        %1052 = vmatpush1.bf16.msra.mxu0 0
        %1053 = vmatprep.subr.bf16.mxu0 0
        %1054 = vmatpush1.bf16.msra.mxu0 0
        %1055 = vmatprep.subr.bf16.mxu0 0
        %1056 = vmatpush1.bf16.msra.mxu0 0
        %1057 = vmatprep.subr.bf16.mxu0 0
        %1058 = vmatpush1.bf16.msra.mxu0 0
        %1059 = vmatprep.subr.bf16.mxu0 0
        %1060 = vmatpush1.bf16.msra.mxu0 0
        %1061 = vmatprep.subr.bf16.mxu0 0
        %1062 = vmatpush1.bf16.msra.mxu0 0
        %1063 = vmatprep.subr.bf16.mxu0 0
        %1064 = vmatpush1.bf16.msra.mxu0 0
        %1065 = vmatprep.mubr.bf16.mxu0 0
        %1066 = vmatmul.mubr.bf16.gmra.mrb[0].mxu0 %v1028
        %v1067 = vpop.f32.mrb[0].mxu0
        %v1068 = vadd.f32 0.0, %v1067
        %v1069 = vpop.f32.mrb[0].mxu0
        %v1070 = vpop.f32.mrb[0].mxu0
        %v1071 = vpop.f32.mrb[0].mxu0
        %1072 = vdwg.mxu0
        %v1073 = vpack.c.bf16 %v972, %v924
        %v1074 = vpack.c.bf16 %v1068, %v1020
        %1075 = vrot.lane.b32.xlu0 %v598, 112
        %v1076 = vpop.permute.xlu0 %1075
        %1077 = vrot.lane.b32.xlu0 %v598, 80
        %v1078 = vpop.permute.xlu0 %1077
        %v1080 = vsel %vm605, %v1076, 0
        %v1083 = vsel %vm605, %v1078, 0
        %1085 = vmatprep.subr.bf16.mxu0 0
        %1086 = vmatpush1.bf16.xpose.msra.mxu0 %v1083
        %1087 = vmatprep.subr.bf16.mxu0 0
        %1088 = vmatpush1.bf16.xpose.msra.mxu0 0
        %1089 = vmatprep.subr.bf16.mxu0 0
        %1090 = vmatpush1.bf16.xpose.msra.mxu0 0
        %1091 = vmatprep.subr.bf16.mxu0 0
        %1092 = vmatpush1.bf16.xpose.msra.mxu0 0
        %1093 = vmatprep.subr.bf16.mxu0 0
        %1094 = vmatpush1.bf16.xpose.msra.mxu0 0
        %1095 = vmatprep.subr.bf16.mxu0 0
        %1096 = vmatpush1.bf16.xpose.msra.mxu0 0
        %1097 = vmatprep.subr.bf16.mxu0 0
        %1098 = vmatpush1.bf16.xpose.msra.mxu0 0
        %1099 = vmatprep.subr.bf16.mxu0 0
        %1100 = vmatpush1.bf16.xpose.msra.mxu0 0
        %1101 = vmatprep.subr.bf16.mxu0 0
        %1102 = vmatpush1.bf16.xpose.msra.mxu0 0
        %1103 = vmatprep.subr.bf16.mxu0 0
        %1104 = vmatpush1.bf16.xpose.msra.mxu0 0
        %1105 = vmatprep.subr.bf16.mxu0 0
        %1106 = vmatpush1.bf16.xpose.msra.mxu0 0
        %1107 = vmatprep.subr.bf16.mxu0 0
        %1108 = vmatpush1.bf16.xpose.msra.mxu0 0
        %1109 = vmatprep.subr.bf16.mxu0 0
        %1110 = vmatpush1.bf16.xpose.msra.mxu0 0
        %1111 = vmatprep.subr.bf16.mxu0 0
        %1112 = vmatpush1.bf16.xpose.msra.mxu0 0
        %1113 = vmatprep.subr.bf16.mxu0 0
        %1114 = vmatpush1.bf16.xpose.msra.mxu0 0
        %1115 = vmatprep.subr.bf16.mxu0 0
        %1116 = vmatpush1.bf16.xpose.msra.mxu0 0
        %1117 = vmatprep.mubr.bf16.mxu0 0
        %1118 = vmatmul.mubr.bf16.gmra.mrb[0].mxu0 %v1080
        %v1119 = vpop.f32.mrb[0].mxu0
        %v1120 = vadd.f32 0.0, %v1119
        %v1121 = vpop.f32.mrb[0].mxu0
        %v1122 = vpop.f32.mrb[0].mxu0
        %v1123 = vpop.f32.mrb[0].mxu0
        %1124 = vdwg.mxu0
        %1125 = vrot.lane.b32.xlu0 %v599, 112
        %v1126 = vpop.permute.xlu0 %1125
        %1127 = vrot.lane.b32.xlu0 %v599, 80
        %v1128 = vpop.permute.xlu0 %1127
        %v1130 = vsel %vm605, %v1126, 0
        %v1133 = vsel %vm605, %v1128, 0
        %1135 = vmatprep.subr.bf16.mxu0 0
        %1136 = vmatpush1.bf16.xpose.msra.mxu0 %v1133
        %1137 = vmatprep.subr.bf16.mxu0 0
        %1138 = vmatpush1.bf16.xpose.msra.mxu0 0
        %1139 = vmatprep.subr.bf16.mxu0 0
        %1140 = vmatpush1.bf16.xpose.msra.mxu0 0
        %1141 = vmatprep.subr.bf16.mxu0 0
        %1142 = vmatpush1.bf16.xpose.msra.mxu0 0
        %1143 = vmatprep.subr.bf16.mxu0 0
        %1144 = vmatpush1.bf16.xpose.msra.mxu0 0
        %1145 = vmatprep.subr.bf16.mxu0 0
        %1146 = vmatpush1.bf16.xpose.msra.mxu0 0
        %1147 = vmatprep.subr.bf16.mxu0 0
        %1148 = vmatpush1.bf16.xpose.msra.mxu0 0
        %1149 = vmatprep.subr.bf16.mxu0 0
        %1150 = vmatpush1.bf16.xpose.msra.mxu0 0
        %1151 = vmatprep.subr.bf16.mxu0 0
        %1152 = vmatpush1.bf16.xpose.msra.mxu0 0
        %1153 = vmatprep.subr.bf16.mxu0 0
        %1154 = vmatpush1.bf16.xpose.msra.mxu0 0
        %1155 = vmatprep.subr.bf16.mxu0 0
        %1156 = vmatpush1.bf16.xpose.msra.mxu0 0
        %1157 = vmatprep.subr.bf16.mxu0 0
        %1158 = vmatpush1.bf16.xpose.msra.mxu0 0
        %1159 = vmatprep.subr.bf16.mxu0 0
        %1160 = vmatpush1.bf16.xpose.msra.mxu0 0
        %1161 = vmatprep.subr.bf16.mxu0 0
        %1162 = vmatpush1.bf16.xpose.msra.mxu0 0
        %1163 = vmatprep.subr.bf16.mxu0 0
        %1164 = vmatpush1.bf16.xpose.msra.mxu0 0
        %1165 = vmatprep.subr.bf16.mxu0 0
        %1166 = vmatpush1.bf16.xpose.msra.mxu0 0
        %1167 = vmatprep.mubr.bf16.mxu0 0
        %1168 = vmatmul.mubr.bf16.gmra.mrb[0].mxu0 %v1130
        %v1169 = vpop.f32.mrb[0].mxu0
        %v1170 = vadd.f32 0.0, %v1169
        %v1171 = vpop.f32.mrb[0].mxu0
        %v1172 = vpop.f32.mrb[0].mxu0
        %v1173 = vpop.f32.mrb[0].mxu0
        %1174 = vdwg.mxu0
        %1175 = vrot.lane.b32.xlu0 %v600, 112
        %v1176 = vpop.permute.xlu0 %1175
        %1177 = vrot.lane.b32.xlu0 %v600, 80
        %v1178 = vpop.permute.xlu0 %1177
        %v1180 = vsel %vm605, %v1176, 0
        %v1183 = vsel %vm605, %v1178, 0
        %1185 = vmatprep.subr.bf16.mxu0 0
        %1186 = vmatpush1.bf16.xpose.msra.mxu0 %v1183
        %1187 = vmatprep.subr.bf16.mxu0 0
        %1188 = vmatpush1.bf16.xpose.msra.mxu0 0
        %1189 = vmatprep.subr.bf16.mxu0 0
        %1190 = vmatpush1.bf16.xpose.msra.mxu0 0
        %1191 = vmatprep.subr.bf16.mxu0 0
        %1192 = vmatpush1.bf16.xpose.msra.mxu0 0
        %1193 = vmatprep.subr.bf16.mxu0 0
        %1194 = vmatpush1.bf16.xpose.msra.mxu0 0
        %1195 = vmatprep.subr.bf16.mxu0 0
        %1196 = vmatpush1.bf16.xpose.msra.mxu0 0
        %1197 = vmatprep.subr.bf16.mxu0 0
        %1198 = vmatpush1.bf16.xpose.msra.mxu0 0
        %1199 = vmatprep.subr.bf16.mxu0 0
        %1200 = vmatpush1.bf16.xpose.msra.mxu0 0
        %1201 = vmatprep.subr.bf16.mxu0 0
        %1202 = vmatpush1.bf16.xpose.msra.mxu0 0
        %1203 = vmatprep.subr.bf16.mxu0 0
        %1204 = vmatpush1.bf16.xpose.msra.mxu0 0
        %1205 = vmatprep.subr.bf16.mxu0 0
        %1206 = vmatpush1.bf16.xpose.msra.mxu0 0
        %1207 = vmatprep.subr.bf16.mxu0 0
        %1208 = vmatpush1.bf16.xpose.msra.mxu0 0
        %1209 = vmatprep.subr.bf16.mxu0 0
        %1210 = vmatpush1.bf16.xpose.msra.mxu0 0
        %1211 = vmatprep.subr.bf16.mxu0 0
        %1212 = vmatpush1.bf16.xpose.msra.mxu0 0
        %1213 = vmatprep.subr.bf16.mxu0 0
        %1214 = vmatpush1.bf16.xpose.msra.mxu0 0
        %1215 = vmatprep.subr.bf16.mxu0 0
        %1216 = vmatpush1.bf16.xpose.msra.mxu0 0
        %1217 = vmatprep.mubr.bf16.mxu0 0
        %1218 = vmatmul.mubr.bf16.gmra.mrb[0].mxu0 %v1180
        %v1219 = vpop.f32.mrb[0].mxu0
        %v1220 = vadd.f32 0.0, %v1219
        %v1221 = vpop.f32.mrb[0].mxu0
        %v1222 = vpop.f32.mrb[0].mxu0
        %v1223 = vpop.f32.mrb[0].mxu0
        %1224 = vdwg.mxu0
        %1225 = vrot.lane.b32.xlu0 %v601, 112
        %v1226 = vpop.permute.xlu0 %1225
        %1227 = vrot.lane.b32.xlu0 %v601, 80
        %v1228 = vpop.permute.xlu0 %1227
        %v1230 = vsel %vm605, %v1226, 0
        %v1233 = vsel %vm605, %v1228, 0
        %1235 = vmatprep.subr.bf16.mxu0 0
        %1236 = vmatpush1.bf16.xpose.msra.mxu0 %v1233
        %1237 = vmatprep.subr.bf16.mxu0 0
        %1238 = vmatpush1.bf16.xpose.msra.mxu0 0
        %1239 = vmatprep.subr.bf16.mxu0 0
        %1240 = vmatpush1.bf16.xpose.msra.mxu0 0
        %1241 = vmatprep.subr.bf16.mxu0 0
        %1242 = vmatpush1.bf16.xpose.msra.mxu0 0
        %1243 = vmatprep.subr.bf16.mxu0 0
        %1244 = vmatpush1.bf16.xpose.msra.mxu0 0
        %1245 = vmatprep.subr.bf16.mxu0 0
        %1246 = vmatpush1.bf16.xpose.msra.mxu0 0
        %1247 = vmatprep.subr.bf16.mxu0 0
        %1248 = vmatpush1.bf16.xpose.msra.mxu0 0
        %1249 = vmatprep.subr.bf16.mxu0 0
        %1250 = vmatpush1.bf16.xpose.msra.mxu0 0
        %1251 = vmatprep.subr.bf16.mxu0 0
        %1252 = vmatpush1.bf16.xpose.msra.mxu0 0
        %1253 = vmatprep.subr.bf16.mxu0 0
        %1254 = vmatpush1.bf16.xpose.msra.mxu0 0
        %1255 = vmatprep.subr.bf16.mxu0 0
        %1256 = vmatpush1.bf16.xpose.msra.mxu0 0
        %1257 = vmatprep.subr.bf16.mxu0 0
        %1258 = vmatpush1.bf16.xpose.msra.mxu0 0
        %1259 = vmatprep.subr.bf16.mxu0 0
        %1260 = vmatpush1.bf16.xpose.msra.mxu0 0
        %1261 = vmatprep.subr.bf16.mxu0 0
        %1262 = vmatpush1.bf16.xpose.msra.mxu0 0
        %1263 = vmatprep.subr.bf16.mxu0 0
        %1264 = vmatpush1.bf16.xpose.msra.mxu0 0
        %1265 = vmatprep.subr.bf16.mxu0 0
        %1266 = vmatpush1.bf16.xpose.msra.mxu0 0
        %1267 = vmatprep.mubr.bf16.mxu0 0
        %1268 = vmatmul.mubr.bf16.gmra.mrb[0].mxu0 %v1230
        %v1269 = vpop.f32.mrb[0].mxu0
        %v1270 = vadd.f32 0.0, %v1269
        %v1271 = vpop.f32.mrb[0].mxu0
        %v1272 = vpop.f32.mrb[0].mxu0
        %v1273 = vpop.f32.mrb[0].mxu0
        %1274 = vdwg.mxu0
        %v1275 = vmul.f32 %v1120, 0.25
        %v1276 = vmul.f32 %v1170, 0.25
        %v1277 = vmul.f32 %v1220, 0.25
        %v1278 = vmul.f32 %v1270, 0.25
        %v1279 = vadd.f32 %v1275, %v810
        %v1280 = vadd.f32 %v1276, %v814
        %v1281 = vadd.f32 %v1277, %v818
        %v1282 = vadd.f32 %v1278, %v822
        %v1283 = vsel %vm831, %v1279, -inf
        %1284 = vmax.xlane.f32.xlu0 %v1283
        %v1285 = vpop.xlane.xlu0 %1284
        %v1286 = vsel %vm831, %v1280, -inf
        %1287 = vmax.xlane.f32.xlu0 %v1286
        %v1288 = vpop.xlane.xlu0 %1287
        %v1289 = vsel %vm831, %v1281, -inf
        %1290 = vmax.xlane.f32.xlu0 %v1289
        %v1291 = vpop.xlane.xlu0 %1290
        %v1292 = vsel %vm831, %v1282, -inf
        %1293 = vmax.xlane.f32.xlu0 %v1292
        %v1294 = vpop.xlane.xlu0 %1293
        %v1295 = vsub.f32 %v1279, %v1285
        %v1296 = vsub.f32 %v1280, %v1288
        %v1297 = vsub.f32 %v1281, %v1291
        %v1298 = vsub.f32 %v1282, %v1294
        %v1299 = vmul.f32 %v1295, 1.442695
        %v1300 = vpow.pop %v1299
        %v1301 = vmul.f32 %v1296, 1.442695
        %v1302 = vpow.pop %v1301
        %v1303 = vmul.f32 %v1297, 1.442695
        %v1304 = vpow.pop %v1303
        %v1305 = vmul.f32 %v1298, 1.442695
        %v1306 = vpow.pop %v1305
        %v1307 = vsel %vm831, %v1300, 0.0
        %1308 = vadd.xlane.f32.xlu0 %v1307
        %v1309 = vpop.xlane.xlu0 %1308
        %v1310 = vsel %vm831, %v1302, 0.0
        %1311 = vadd.xlane.f32.xlu0 %v1310
        %v1312 = vpop.xlane.xlu0 %1311
        %v1313 = vsel %vm831, %v1304, 0.0
        %1314 = vadd.xlane.f32.xlu0 %v1313
        %v1315 = vpop.xlane.xlu0 %1314
        %v1316 = vsel %vm831, %v1306, 0.0
        %1317 = vadd.xlane.f32.xlu0 %v1316
        %v1318 = vpop.xlane.xlu0 %1317
        %v1319 = vrcp.pop %v1309
        %v1320 = vmul.f32 %v1300, %v1319
        %v1321 = vrcp.pop %v1312
        %v1322 = vmul.f32 %v1302, %v1321
        %v1323 = vrcp.pop %v1315
        %v1324 = vmul.f32 %v1304, %v1323
        %v1325 = vrcp.pop %v1318
        %v1326 = vmul.f32 %v1306, %v1325
        %v1327 = vpack.c.bf16 %v1320, %v1320
        %v1328 = vpack.c.bf16 %v1322, %v1322
        %v1329 = vpack.c.bf16 %v1324, %v1324
        %v1330 = vpack.c.bf16 %v1326, %v1326
        %1331 = vrot.lane.b32.xlu0 %v598, 48
        %v1332 = vpop.permute.xlu0 %1331
        %v1334 = vsel %vm831, %v1327, 0
        %v1337 = vsel %vm885, %v1332, 0
        %1339 = vmatprep.subr.bf16.mxu0 0
        %1340 = vmatpush1.bf16.msra.mxu0 %v1337
        %1341 = vmatprep.subr.bf16.mxu0 0
        %1342 = vmatpush1.bf16.msra.mxu0 0
        %1343 = vmatprep.subr.bf16.mxu0 0
        %1344 = vmatpush1.bf16.msra.mxu0 0
        %1345 = vmatprep.subr.bf16.mxu0 0
        %1346 = vmatpush1.bf16.msra.mxu0 0
        %1347 = vmatprep.subr.bf16.mxu0 0
        %1348 = vmatpush1.bf16.msra.mxu0 0
        %1349 = vmatprep.subr.bf16.mxu0 0
        %1350 = vmatpush1.bf16.msra.mxu0 0
        %1351 = vmatprep.subr.bf16.mxu0 0
        %1352 = vmatpush1.bf16.msra.mxu0 0
        %1353 = vmatprep.subr.bf16.mxu0 0
        %1354 = vmatpush1.bf16.msra.mxu0 0
        %1355 = vmatprep.subr.bf16.mxu0 0
        %1356 = vmatpush1.bf16.msra.mxu0 0
        %1357 = vmatprep.subr.bf16.mxu0 0
        %1358 = vmatpush1.bf16.msra.mxu0 0
        %1359 = vmatprep.subr.bf16.mxu0 0
        %1360 = vmatpush1.bf16.msra.mxu0 0
        %1361 = vmatprep.subr.bf16.mxu0 0
        %1362 = vmatpush1.bf16.msra.mxu0 0
        %1363 = vmatprep.subr.bf16.mxu0 0
        %1364 = vmatpush1.bf16.msra.mxu0 0
        %1365 = vmatprep.subr.bf16.mxu0 0
        %1366 = vmatpush1.bf16.msra.mxu0 0
        %1367 = vmatprep.subr.bf16.mxu0 0
        %1368 = vmatpush1.bf16.msra.mxu0 0
        %1369 = vmatprep.subr.bf16.mxu0 0
        %1370 = vmatpush1.bf16.msra.mxu0 0
        %1371 = vmatprep.mubr.bf16.mxu0 0
        %1372 = vmatmul.mubr.bf16.gmra.mrb[0].mxu0 %v1334
        %v1373 = vpop.f32.mrb[0].mxu0
        %v1374 = vadd.f32 0.0, %v1373
        %v1375 = vpop.f32.mrb[0].mxu0
        %v1376 = vpop.f32.mrb[0].mxu0
        %v1377 = vpop.f32.mrb[0].mxu0
        %1378 = vdwg.mxu0
        %1379 = vrot.lane.b32.xlu0 %v599, 48
        %v1380 = vpop.permute.xlu0 %1379
        %v1382 = vsel %vm831, %v1328, 0
        %v1385 = vsel %vm885, %v1380, 0
        %1387 = vmatprep.subr.bf16.mxu0 0
        %1388 = vmatpush1.bf16.msra.mxu0 %v1385
        %1389 = vmatprep.subr.bf16.mxu0 0
        %1390 = vmatpush1.bf16.msra.mxu0 0
        %1391 = vmatprep.subr.bf16.mxu0 0
        %1392 = vmatpush1.bf16.msra.mxu0 0
        %1393 = vmatprep.subr.bf16.mxu0 0
        %1394 = vmatpush1.bf16.msra.mxu0 0
        %1395 = vmatprep.subr.bf16.mxu0 0
        %1396 = vmatpush1.bf16.msra.mxu0 0
        %1397 = vmatprep.subr.bf16.mxu0 0
        %1398 = vmatpush1.bf16.msra.mxu0 0
        %1399 = vmatprep.subr.bf16.mxu0 0
        %1400 = vmatpush1.bf16.msra.mxu0 0
        %1401 = vmatprep.subr.bf16.mxu0 0
        %1402 = vmatpush1.bf16.msra.mxu0 0
        %1403 = vmatprep.subr.bf16.mxu0 0
        %1404 = vmatpush1.bf16.msra.mxu0 0
        %1405 = vmatprep.subr.bf16.mxu0 0
        %1406 = vmatpush1.bf16.msra.mxu0 0
        %1407 = vmatprep.subr.bf16.mxu0 0
        %1408 = vmatpush1.bf16.msra.mxu0 0
        %1409 = vmatprep.subr.bf16.mxu0 0
        %1410 = vmatpush1.bf16.msra.mxu0 0
        %1411 = vmatprep.subr.bf16.mxu0 0
        %1412 = vmatpush1.bf16.msra.mxu0 0
        %1413 = vmatprep.subr.bf16.mxu0 0
        %1414 = vmatpush1.bf16.msra.mxu0 0
        %1415 = vmatprep.subr.bf16.mxu0 0
        %1416 = vmatpush1.bf16.msra.mxu0 0
        %1417 = vmatprep.subr.bf16.mxu0 0
        %1418 = vmatpush1.bf16.msra.mxu0 0
        %1419 = vmatprep.mubr.bf16.mxu0 0
        %1420 = vmatmul.mubr.bf16.gmra.mrb[0].mxu0 %v1382
        %v1421 = vpop.f32.mrb[0].mxu0
        %v1422 = vadd.f32 0.0, %v1421
        %v1423 = vpop.f32.mrb[0].mxu0
        %v1424 = vpop.f32.mrb[0].mxu0
        %v1425 = vpop.f32.mrb[0].mxu0
        %1426 = vdwg.mxu0
        %1427 = vrot.lane.b32.xlu0 %v600, 48
        %v1428 = vpop.permute.xlu0 %1427
        %v1430 = vsel %vm831, %v1329, 0
        %v1433 = vsel %vm885, %v1428, 0
        %1435 = vmatprep.subr.bf16.mxu0 0
        %1436 = vmatpush1.bf16.msra.mxu0 %v1433
        %1437 = vmatprep.subr.bf16.mxu0 0
        %1438 = vmatpush1.bf16.msra.mxu0 0
        %1439 = vmatprep.subr.bf16.mxu0 0
        %1440 = vmatpush1.bf16.msra.mxu0 0
        %1441 = vmatprep.subr.bf16.mxu0 0
        %1442 = vmatpush1.bf16.msra.mxu0 0
        %1443 = vmatprep.subr.bf16.mxu0 0
        %1444 = vmatpush1.bf16.msra.mxu0 0
        %1445 = vmatprep.subr.bf16.mxu0 0
        %1446 = vmatpush1.bf16.msra.mxu0 0
        %1447 = vmatprep.subr.bf16.mxu0 0
        %1448 = vmatpush1.bf16.msra.mxu0 0
        %1449 = vmatprep.subr.bf16.mxu0 0
        %1450 = vmatpush1.bf16.msra.mxu0 0
        %1451 = vmatprep.subr.bf16.mxu0 0
        %1452 = vmatpush1.bf16.msra.mxu0 0
        %1453 = vmatprep.subr.bf16.mxu0 0
        %1454 = vmatpush1.bf16.msra.mxu0 0
        %1455 = vmatprep.subr.bf16.mxu0 0
        %1456 = vmatpush1.bf16.msra.mxu0 0
        %1457 = vmatprep.subr.bf16.mxu0 0
        %1458 = vmatpush1.bf16.msra.mxu0 0
        %1459 = vmatprep.subr.bf16.mxu0 0
        %1460 = vmatpush1.bf16.msra.mxu0 0
        %1461 = vmatprep.subr.bf16.mxu0 0
        %1462 = vmatpush1.bf16.msra.mxu0 0
        %1463 = vmatprep.subr.bf16.mxu0 0
        %1464 = vmatpush1.bf16.msra.mxu0 0
        %1465 = vmatprep.subr.bf16.mxu0 0
        %1466 = vmatpush1.bf16.msra.mxu0 0
        %1467 = vmatprep.mubr.bf16.mxu0 0
        %1468 = vmatmul.mubr.bf16.gmra.mrb[0].mxu0 %v1430
        %v1469 = vpop.f32.mrb[0].mxu0
        %v1470 = vadd.f32 0.0, %v1469
        %v1471 = vpop.f32.mrb[0].mxu0
        %v1472 = vpop.f32.mrb[0].mxu0
        %v1473 = vpop.f32.mrb[0].mxu0
        %1474 = vdwg.mxu0
        %1475 = vrot.lane.b32.xlu0 %v601, 48
        %v1476 = vpop.permute.xlu0 %1475
        %v1478 = vsel %vm831, %v1330, 0
        %v1481 = vsel %vm885, %v1476, 0
        %1483 = vmatprep.subr.bf16.mxu0 0
        %1484 = vmatpush1.bf16.msra.mxu0 %v1481
        %1485 = vmatprep.subr.bf16.mxu0 0
        %1486 = vmatpush1.bf16.msra.mxu0 0
        %1487 = vmatprep.subr.bf16.mxu0 0
        %1488 = vmatpush1.bf16.msra.mxu0 0
        %1489 = vmatprep.subr.bf16.mxu0 0
        %1490 = vmatpush1.bf16.msra.mxu0 0
        %1491 = vmatprep.subr.bf16.mxu0 0
        %1492 = vmatpush1.bf16.msra.mxu0 0
        %1493 = vmatprep.subr.bf16.mxu0 0
        %1494 = vmatpush1.bf16.msra.mxu0 0
        %1495 = vmatprep.subr.bf16.mxu0 0
        %1496 = vmatpush1.bf16.msra.mxu0 0
        %1497 = vmatprep.subr.bf16.mxu0 0
        %1498 = vmatpush1.bf16.msra.mxu0 0
        %1499 = vmatprep.subr.bf16.mxu0 0
        %1500 = vmatpush1.bf16.msra.mxu0 0
        %1501 = vmatprep.subr.bf16.mxu0 0
        %1502 = vmatpush1.bf16.msra.mxu0 0
        %1503 = vmatprep.subr.bf16.mxu0 0
        %1504 = vmatpush1.bf16.msra.mxu0 0
        %1505 = vmatprep.subr.bf16.mxu0 0
        %1506 = vmatpush1.bf16.msra.mxu0 0
        %1507 = vmatprep.subr.bf16.mxu0 0
        %1508 = vmatpush1.bf16.msra.mxu0 0
        %1509 = vmatprep.subr.bf16.mxu0 0
        %1510 = vmatpush1.bf16.msra.mxu0 0
        %1511 = vmatprep.subr.bf16.mxu0 0
        %1512 = vmatpush1.bf16.msra.mxu0 0
        %1513 = vmatprep.subr.bf16.mxu0 0
        %1514 = vmatpush1.bf16.msra.mxu0 0
        %1515 = vmatprep.mubr.bf16.mxu0 0
        %1516 = vmatmul.mubr.bf16.gmra.mrb[0].mxu0 %v1478
        %v1517 = vpop.f32.mrb[0].mxu0
        %v1518 = vadd.f32 0.0, %v1517
        %v1519 = vpop.f32.mrb[0].mxu0
        %v1520 = vpop.f32.mrb[0].mxu0
        %v1521 = vpop.f32.mrb[0].mxu0
        %1522 = vdwg.mxu0
        %v1523 = vpack.c.bf16 %v1422, %v1374
        %v1524 = vpack.c.bf16 %v1518, %v1470
        %v1527 = vunpack.c.l.b16 %v596
        %v1528 = vunpack.c.l.b16 %v597
        %v1529 = vpack.c.b16 %v1528, %v1527
        %v1532 = vsel %vm605, %v1523, 0
        %v1535 = vsel %vm605, %v1524, 0
        %1537 = vmatprep.subr.bf16.mxu0 0
        %1538 = vmatpush1.bf16.msra.mxu0 %v1529
        %1539 = vmatprep.subr.bf16.mxu0 0
        %1540 = vmatpush1.bf16.msra.mxu0 0
        %1541 = vmatprep.subr.bf16.mxu0 0
        %1542 = vmatpush1.bf16.msra.mxu0 0
        %1543 = vmatprep.subr.bf16.mxu0 0
        %1544 = vmatpush1.bf16.msra.mxu0 0
        %1545 = vmatprep.subr.bf16.mxu0 0
        %1546 = vmatpush1.bf16.msra.mxu0 0
        %1547 = vmatprep.subr.bf16.mxu0 0
        %1548 = vmatpush1.bf16.msra.mxu0 0
        %1549 = vmatprep.subr.bf16.mxu0 0
        %1550 = vmatpush1.bf16.msra.mxu0 0
        %1551 = vmatprep.subr.bf16.mxu0 0
        %1552 = vmatpush1.bf16.msra.mxu0 0
        %1553 = vmatprep.subr.bf16.mxu0 0
        %1554 = vmatpush1.bf16.msra.mxu0 0
        %1555 = vmatprep.subr.bf16.mxu0 0
        %1556 = vmatpush1.bf16.msra.mxu0 0
        %1557 = vmatprep.subr.bf16.mxu0 0
        %1558 = vmatpush1.bf16.msra.mxu0 0
        %1559 = vmatprep.subr.bf16.mxu0 0
        %1560 = vmatpush1.bf16.msra.mxu0 0
        %1561 = vmatprep.subr.bf16.mxu0 0
        %1562 = vmatpush1.bf16.msra.mxu0 0
        %1563 = vmatprep.subr.bf16.mxu0 0
        %1564 = vmatpush1.bf16.msra.mxu0 0
        %1565 = vmatprep.subr.bf16.mxu0 0
        %1566 = vmatpush1.bf16.msra.mxu0 0
        %1567 = vmatprep.subr.bf16.mxu0 0
        %1568 = vmatpush1.bf16.msra.mxu0 0
        %1569 = vmatprep.mubr.bf16.mxu0 0
        %1570 = vmatmul.mubr.bf16.gmra.mrb[0].mxu0 %v1532
        %v1571 = vpop.f32.mrb[0].mxu0
        %v1572 = vadd.f32 0.0, %v1571
        %v1573 = vpop.f32.mrb[0].mxu0
        %v1574 = vpop.f32.mrb[0].mxu0
        %v1575 = vadd.f32 0.0, %v1574
        %v1576 = vpop.f32.mrb[0].mxu0
        %1577 = vmatprep.mubr.bf16.mxu0 0
        %1578 = vmatmul.mubr.bf16.gmra.mrb[0].mxu0 %v1535
        %v1579 = vpop.f32.mrb[0].mxu0
        %v1580 = vadd.f32 0.0, %v1579
        %v1581 = vpop.f32.mrb[0].mxu0
        %v1582 = vpop.f32.mrb[0].mxu0
        %v1583 = vadd.f32 0.0, %v1582
        %v1584 = vpop.f32.mrb[0].mxu0
        %1585 = vdwg.mxu0
        %v1588 = vunpack.c.l.b16 %v594
        %v1589 = vunpack.c.l.b16 %v595
        %v1590 = vpack.c.b16 %v1589, %v1588
        %v1593 = vsel %vm605, %v1073, 0
        %v1596 = vsel %vm605, %v1074, 0
        %1598 = vmatprep.subr.bf16.mxu0 0
        %1599 = vmatpush1.bf16.msra.mxu0 %v1590
        %1600 = vmatprep.subr.bf16.mxu0 0
        %1601 = vmatpush1.bf16.msra.mxu0 0
        %1602 = vmatprep.subr.bf16.mxu0 0
        %1603 = vmatpush1.bf16.msra.mxu0 0
        %1604 = vmatprep.subr.bf16.mxu0 0
        %1605 = vmatpush1.bf16.msra.mxu0 0
        %1606 = vmatprep.subr.bf16.mxu0 0
        %1607 = vmatpush1.bf16.msra.mxu0 0
        %1608 = vmatprep.subr.bf16.mxu0 0
        %1609 = vmatpush1.bf16.msra.mxu0 0
        %1610 = vmatprep.subr.bf16.mxu0 0
        %1611 = vmatpush1.bf16.msra.mxu0 0
        %1612 = vmatprep.subr.bf16.mxu0 0
        %1613 = vmatpush1.bf16.msra.mxu0 0
        %1614 = vmatprep.subr.bf16.mxu0 0
        %1615 = vmatpush1.bf16.msra.mxu0 0
        %1616 = vmatprep.subr.bf16.mxu0 0
        %1617 = vmatpush1.bf16.msra.mxu0 0
        %1618 = vmatprep.subr.bf16.mxu0 0
        %1619 = vmatpush1.bf16.msra.mxu0 0
        %1620 = vmatprep.subr.bf16.mxu0 0
        %1621 = vmatpush1.bf16.msra.mxu0 0
        %1622 = vmatprep.subr.bf16.mxu0 0
        %1623 = vmatpush1.bf16.msra.mxu0 0
        %1624 = vmatprep.subr.bf16.mxu0 0
        %1625 = vmatpush1.bf16.msra.mxu0 0
        %1626 = vmatprep.subr.bf16.mxu0 0
        %1627 = vmatpush1.bf16.msra.mxu0 0
        %1628 = vmatprep.subr.bf16.mxu0 0
        %1629 = vmatpush1.bf16.msra.mxu0 0
        %1630 = vmatprep.mubr.bf16.mxu0 0
        %1631 = vmatmul.mubr.bf16.gmra.mrb[0].mxu0 %v1593
        %v1632 = vpop.f32.mrb[0].mxu0
        %v1633 = vadd.f32 %v1572, %v1632
        %v1634 = vpop.f32.mrb[0].mxu0
        %v1635 = vpop.f32.mrb[0].mxu0
        %v1636 = vadd.f32 %v1575, %v1635
        %v1637 = vpop.f32.mrb[0].mxu0
        %1638 = vmatprep.mubr.bf16.mxu0 0
        %1639 = vmatmul.mubr.bf16.gmra.mrb[0].mxu0 %v1596
        %v1640 = vpop.f32.mrb[0].mxu0
        %v1641 = vadd.f32 %v1580, %v1640
        %v1642 = vpop.f32.mrb[0].mxu0
        %v1643 = vpop.f32.mrb[0].mxu0
        %v1644 = vadd.f32 %v1583, %v1643
        %v1645 = vpop.f32.mrb[0].mxu0
        %1646 = vdwg.mxu0
        %v1647 = vadd.f32 %v507, %v1633
        %v1648 = vadd.f32 %v508, %v1636
        %v1649 = vadd.f32 %v509, %v1641
        %v1650 = vadd.f32 %v510, %v1644
        %v1651 = vlaneseq
        %v1652 = vshrl.u32 %v1651, 7
        %v1653 = vsub.s32 1, %v1652
        %v1654 = vrot.slane %v511, %v1653
        %v1655 = vadd.f32 %v1647, %v1654
        %v1656 = vadd.f32 %v1648, %v1654
        %v1657 = vadd.f32 %v1649, %v1654
        %v1658 = vadd.f32 %v1650, %v1654
        %v1659 = vsel %vm534, %v1655, 0.0
        %1660 = vadd.xlane.f32.xlu0 %v1659
        %v1661 = vpop.xlane.xlu0 %1660
        %v1662 = vsel %vm534, %v1656, 0.0
        %1663 = vadd.xlane.f32.xlu0 %v1662
        %v1664 = vpop.xlane.xlu0 %1663
        %v1665 = vsel %vm534, %v1657, 0.0
        %1666 = vadd.xlane.f32.xlu0 %v1665
        %v1667 = vpop.xlane.xlu0 %1666
        %v1668 = vsel %vm534, %v1658, 0.0
        %1669 = vadd.xlane.f32.xlu0 %v1668
        %v1670 = vpop.xlane.xlu0 %1669
        %v1671 = vrcp.pop 32.0
        %v1672 = vmul.f32 %v1661, %v1671
        %v1673 = vmul.f32 %v1664, %v1671
        %v1674 = vmul.f32 %v1667, %v1671
        %v1675 = vmul.f32 %v1670, %v1671
        %v1676 = vsub.f32 %v1655, %v1672
        %v1677 = vsub.f32 %v1656, %v1673
        %v1678 = vsub.f32 %v1657, %v1674
        %v1679 = vsub.f32 %v1658, %v1675
        %v1680 = vmul.f32 %v1676, %v1676
        %v1681 = vmul.f32 %v1677, %v1677
        %v1682 = vmul.f32 %v1678, %v1678
        %v1683 = vmul.f32 %v1679, %v1679
        %v1684 = vsel %vm534, %v1680, 0.0
        %1685 = vadd.xlane.f32.xlu0 %v1684
        %v1686 = vpop.xlane.xlu0 %1685
        %v1687 = vsel %vm534, %v1681, 0.0
        %1688 = vadd.xlane.f32.xlu0 %v1687
        %v1689 = vpop.xlane.xlu0 %1688
        %v1690 = vsel %vm534, %v1682, 0.0
        %1691 = vadd.xlane.f32.xlu0 %v1690
        %v1692 = vpop.xlane.xlu0 %1691
        %v1693 = vsel %vm534, %v1683, 0.0
        %1694 = vadd.xlane.f32.xlu0 %v1693
        %v1695 = vpop.xlane.xlu0 %1694
        %v1696 = vmul.f32 %v1686, %v1671
        %v1697 = vmul.f32 %v1689, %v1671
        %v1698 = vmul.f32 %v1692, %v1671
        %v1699 = vmul.f32 %v1695, %v1671
        %v1700 = vadd.f32 %v1696, 1e-12
        %v1701 = vadd.f32 %v1697, 1e-12
        %v1702 = vadd.f32 %v1698, 1e-12
        %v1703 = vadd.f32 %v1699, 1e-12
        %v1704 = vrsqrt.pop %v1700
        %v1705 = vrsqrt.pop %v1701
        %v1706 = vrsqrt.pop %v1702
        %v1707 = vrsqrt.pop %v1703
        %v1708 = vmul.f32 %v1676, %v1704
        %v1709 = vmul.f32 %v1677, %v1705
        %v1710 = vmul.f32 %v1678, %v1706
        %v1711 = vmul.f32 %v1679, %v1707
        %v1712 = vlaneseq
        %v1713 = vshrl.u32 %v1712, 7
        %v1714 = vsub.s32 2, %v1713
        %v1715 = vrot.slane %v511, %v1714
        %v1716 = vmul.f32 %v1708, %v1715
        %v1717 = vmul.f32 %v1709, %v1715
        %v1718 = vmul.f32 %v1710, %v1715
        %v1719 = vmul.f32 %v1711, %v1715
        %v1720 = vlaneseq
        %v1721 = vshrl.u32 %v1720, 7
        %v1722 = vsub.s32 3, %v1721
        %v1723 = vrot.slane %v511, %v1722
        %v1724 = vadd.f32 %v1716, %v1723
        %v1725 = vadd.f32 %v1717, %v1723
        %v1726 = vadd.f32 %v1718, %v1723
        %v1727 = vadd.f32 %v1719, %v1723
        %v1728 = vpack.c.bf16 %v1725, %v1724
        %v1729 = vpack.c.bf16 %v1727, %v1726
        %v1730 = vld [vmem:[%s413] sm:$0xf]
        %v1731 = vld [vmem:[%s413 + $0x4] sm:$0xf]
        %v1732 = vld [vmem:[%s413 + $0x8] sm:$0xf]
        %v1733 = vld [vmem:[%s413 + $0xc] sm:$0xf]
        %v1734 = vlaneseq
        %v1735 = vshrl.u32 %v1734, 7
        %v1736 = vsub.s32 4, %v1735
        %v1737 = vrot.slane %v511, %v1736
        %v1742 = vunpack.c.l.b16 %v1730
        %v1743 = vunpack.c.l.b16 %v1731
        %v1744 = vunpack.c.l.b16 %v1732
        %v1745 = vunpack.c.l.b16 %v1733
        %v1746 = vpack.c.b16 %v1743, %v1742
        %v1747 = vpack.c.b16 %v1745, %v1744
        %v1751 = vsel %vm534, %v1728, 0
        %v1754 = vsel %vm534, %v1729, 0
        %1756 = vmatprep.subr.bf16.mxu0 0
        %1757 = vmatpush1.bf16.msra.mxu0 %v1746
        %1758 = vmatprep.subr.bf16.mxu0 0
        %1759 = vmatpush1.bf16.msra.mxu0 %v1747
        %1760 = vmatprep.subr.bf16.mxu0 0
        %1761 = vmatpush1.bf16.msra.mxu0 0
        %1762 = vmatprep.subr.bf16.mxu0 0
        %1763 = vmatpush1.bf16.msra.mxu0 0
        %1764 = vmatprep.subr.bf16.mxu0 0
        %1765 = vmatpush1.bf16.msra.mxu0 0
        %1766 = vmatprep.subr.bf16.mxu0 0
        %1767 = vmatpush1.bf16.msra.mxu0 0
        %1768 = vmatprep.subr.bf16.mxu0 0
        %1769 = vmatpush1.bf16.msra.mxu0 0
        %1770 = vmatprep.subr.bf16.mxu0 0
        %1771 = vmatpush1.bf16.msra.mxu0 0
        %1772 = vmatprep.subr.bf16.mxu0 0
        %1773 = vmatpush1.bf16.msra.mxu0 0
        %1774 = vmatprep.subr.bf16.mxu0 0
        %1775 = vmatpush1.bf16.msra.mxu0 0
        %1776 = vmatprep.subr.bf16.mxu0 0
        %1777 = vmatpush1.bf16.msra.mxu0 0
        %1778 = vmatprep.subr.bf16.mxu0 0
        %1779 = vmatpush1.bf16.msra.mxu0 0
        %1780 = vmatprep.subr.bf16.mxu0 0
        %1781 = vmatpush1.bf16.msra.mxu0 0
        %1782 = vmatprep.subr.bf16.mxu0 0
        %1783 = vmatpush1.bf16.msra.mxu0 0
        %1784 = vmatprep.subr.bf16.mxu0 0
        %1785 = vmatpush1.bf16.msra.mxu0 0
        %1786 = vmatprep.subr.bf16.mxu0 0
        %1787 = vmatpush1.bf16.msra.mxu0 0
        %1788 = vmatprep.mubr.bf16.mxu0 0
        %1789 = vmatmul.mubr.bf16.gmra.mrb[0].mxu0 %v1751
        %v1790 = vpop.f32.mrb[0].mxu0
        %v1791 = vadd.f32 %v1737, %v1790
        %v1792 = vpop.f32.mrb[0].mxu0
        %v1793 = vpop.f32.mrb[0].mxu0
        %v1794 = vadd.f32 %v1737, %v1793
        %v1795 = vpop.f32.mrb[0].mxu0
        %1796 = vmatprep.mubr.bf16.mxu0 0
        %1797 = vmatmul.mubr.bf16.gmra.mrb[0].mxu0 %v1754
        %v1798 = vpop.f32.mrb[0].mxu0
        %v1799 = vadd.f32 %v1737, %v1798
        %v1800 = vpop.f32.mrb[0].mxu0
        %v1801 = vpop.f32.mrb[0].mxu0
        %v1802 = vadd.f32 %v1737, %v1801
        %v1803 = vpop.f32.mrb[0].mxu0
        %1804 = vdwg.mxu0
        %v1805 = vmul.f32 %v1791, 0.5
        %v1806 = vmul.f32 %v1794, 0.5
        %v1807 = vmul.f32 %v1799, 0.5
        %v1808 = vmul.f32 %v1802, 0.5
        %v1809 = vmul.f32 %v1791, 0.044715
        %v1810 = vmul.f32 %v1794, 0.044715
        %v1811 = vmul.f32 %v1799, 0.044715
        %v1812 = vmul.f32 %v1802, 0.044715
        %v1813 = vmul.f32 %v1809, %v1791
        %v1814 = vmul.f32 %v1810, %v1794
        %v1815 = vmul.f32 %v1811, %v1799
        %v1816 = vmul.f32 %v1812, %v1802
        %v1817 = vmul.f32 %v1813, %v1791
        %v1818 = vmul.f32 %v1814, %v1794
        %v1819 = vmul.f32 %v1815, %v1799
        %v1820 = vmul.f32 %v1816, %v1802
        %v1821 = vadd.f32 %v1791, %v1817
        %v1822 = vadd.f32 %v1794, %v1818
        %v1823 = vadd.f32 %v1799, %v1819
        %v1824 = vadd.f32 %v1802, %v1820
        %v1825 = vmul.f32 %v1821, 0.7978846
        %v1826 = vmul.f32 %v1822, 0.7978846
        %v1827 = vmul.f32 %v1823, 0.7978846
        %v1828 = vmul.f32 %v1824, 0.7978846
        %v1829 = vtanh.pop %v1825
        %v1830 = vtanh.pop %v1826
        %v1831 = vtanh.pop %v1827
        %v1832 = vtanh.pop %v1828
        %v1833 = vadd.f32 %v1829, 1.0
        %v1834 = vadd.f32 %v1830, 1.0
        %v1835 = vadd.f32 %v1831, 1.0
        %v1836 = vadd.f32 %v1832, 1.0
        %v1837 = vmul.f32 %v1805, %v1833
        %v1838 = vmul.f32 %v1806, %v1834
        %v1839 = vmul.f32 %v1807, %v1835
        %v1840 = vmul.f32 %v1808, %v1836
        %v1841 = vpack.c.bf16 %v1838, %v1837
        %v1842 = vpack.c.bf16 %v1840, %v1839
        %v1843 = vld [vmem:[%s418] sm:$0xf]
        %v1844 = vld [vmem:[%s418 + $0x4] sm:$0xf]
        %v1845 = vld [vmem:[%s418 + $0x8] sm:$0xf]
        %v1846 = vld [vmem:[%s418 + $0xc] sm:$0xf]
        %v1847 = vld [vmem:[%s418 + $0x10] sm:$0xf]
        %v1848 = vld [vmem:[%s418 + $0x14] sm:$0xf]
        %v1849 = vld [vmem:[%s418 + $0x18] sm:$0xf]
        %v1850 = vld [vmem:[%s418 + $0x1c] sm:$0xf]
        %v1851 = vlaneseq
        %v1852 = vshrl.u32 %v1851, 7
        %v1853 = vsub.s32 5, %v1852
        %v1854 = vrot.slane %v511, %v1853
        %v1863 = vunpack.c.l.b16 %v1843
        %v1864 = vunpack.c.l.b16 %v1844
        %v1865 = vunpack.c.l.b16 %v1845
        %v1866 = vunpack.c.l.b16 %v1846
        %v1867 = vunpack.c.l.b16 %v1847
        %v1868 = vunpack.c.l.b16 %v1848
        %v1869 = vunpack.c.l.b16 %v1849
        %v1870 = vunpack.c.l.b16 %v1850
        %v1871 = vpack.c.b16 %v1864, %v1863
        %v1872 = vpack.c.b16 %v1866, %v1865
        %v1873 = vpack.c.b16 %v1868, %v1867
        %v1874 = vpack.c.b16 %v1870, %v1869
        %vm1879 = vcmask 523264
        %v1881 = vsel %vm1879, %v1841, 0
        %v1884 = vsel %vm1879, %v1842, 0
        %1886 = vmatprep.subr.bf16.mxu0 0
        %1887 = vmatpush1.bf16.msra.mxu0 %v1871
        %1888 = vmatprep.subr.bf16.mxu0 0
        %1889 = vmatpush1.bf16.msra.mxu0 %v1872
        %1890 = vmatprep.subr.bf16.mxu0 0
        %1891 = vmatpush1.bf16.msra.mxu0 %v1873
        %1892 = vmatprep.subr.bf16.mxu0 0
        %1893 = vmatpush1.bf16.msra.mxu0 %v1874
        %1894 = vmatprep.subr.bf16.mxu0 0
        %1895 = vmatpush1.bf16.msra.mxu0 0
        %1896 = vmatprep.subr.bf16.mxu0 0
        %1897 = vmatpush1.bf16.msra.mxu0 0
        %1898 = vmatprep.subr.bf16.mxu0 0
        %1899 = vmatpush1.bf16.msra.mxu0 0
        %1900 = vmatprep.subr.bf16.mxu0 0
        %1901 = vmatpush1.bf16.msra.mxu0 0
        %1902 = vmatprep.subr.bf16.mxu0 0
        %1903 = vmatpush1.bf16.msra.mxu0 0
        %1904 = vmatprep.subr.bf16.mxu0 0
        %1905 = vmatpush1.bf16.msra.mxu0 0
        %1906 = vmatprep.subr.bf16.mxu0 0
        %1907 = vmatpush1.bf16.msra.mxu0 0
        %1908 = vmatprep.subr.bf16.mxu0 0
        %1909 = vmatpush1.bf16.msra.mxu0 0
        %1910 = vmatprep.subr.bf16.mxu0 0
        %1911 = vmatpush1.bf16.msra.mxu0 0
        %1912 = vmatprep.subr.bf16.mxu0 0
        %1913 = vmatpush1.bf16.msra.mxu0 0
        %1914 = vmatprep.subr.bf16.mxu0 0
        %1915 = vmatpush1.bf16.msra.mxu0 0
        %1916 = vmatprep.subr.bf16.mxu0 0
        %1917 = vmatpush1.bf16.msra.mxu0 0
        %1918 = vmatprep.mubr.bf16.mxu0 0
        %1919 = vmatmul.mubr.bf16.gmra.mrb[0].mxu0 %v1881
        %v1920 = vpop.f32.mrb[0].mxu0
        %v1921 = vadd.f32 %v1854, %v1920
        %v1922 = vpop.f32.mrb[0].mxu0
        %v1923 = vpop.f32.mrb[0].mxu0
        %v1924 = vadd.f32 %v1854, %v1923
        %v1925 = vpop.f32.mrb[0].mxu0
        %1926 = vmatprep.mubr.bf16.mxu0 0
        %1927 = vmatmul.mubr.bf16.gmra.mrb[0].mxu0 %v1884
        %v1928 = vpop.f32.mrb[0].mxu0
        %v1929 = vadd.f32 %v1854, %v1928
        %v1930 = vpop.f32.mrb[0].mxu0
        %v1931 = vpop.f32.mrb[0].mxu0
        %v1932 = vadd.f32 %v1854, %v1931
        %v1933 = vpop.f32.mrb[0].mxu0
        %1934 = vdwg.mxu0
        %v1935 = vadd.f32 %v1724, %v1921
        %v1936 = vadd.f32 %v1725, %v1924
        %v1937 = vadd.f32 %v1726, %v1929
        %v1938 = vadd.f32 %v1727, %v1932
        %v1939 = vsel %vm534, %v1935, 0.0
        %1940 = vadd.xlane.f32.xlu0 %v1939
        %v1941 = vpop.xlane.xlu0 %1940
        %v1942 = vsel %vm534, %v1936, 0.0
        %1943 = vadd.xlane.f32.xlu0 %v1942
        %v1944 = vpop.xlane.xlu0 %1943
        %v1945 = vsel %vm534, %v1937, 0.0
        %1946 = vadd.xlane.f32.xlu0 %v1945
        %v1947 = vpop.xlane.xlu0 %1946
        %v1948 = vsel %vm534, %v1938, 0.0
        %1949 = vadd.xlane.f32.xlu0 %v1948
        %v1950 = vpop.xlane.xlu0 %1949
        %v1951 = vmul.f32 %v1941, %v1671
        %v1952 = vmul.f32 %v1944, %v1671
        %v1953 = vmul.f32 %v1947, %v1671
        %v1954 = vmul.f32 %v1950, %v1671
        %v1955 = vsub.f32 %v1935, %v1951
        %v1956 = vsub.f32 %v1936, %v1952
        %v1957 = vsub.f32 %v1937, %v1953
        %v1958 = vsub.f32 %v1938, %v1954
        %v1959 = vmul.f32 %v1955, %v1955
        %v1960 = vmul.f32 %v1956, %v1956
        %v1961 = vmul.f32 %v1957, %v1957
        %v1962 = vmul.f32 %v1958, %v1958
        %v1963 = vsel %vm534, %v1959, 0.0
        %1964 = vadd.xlane.f32.xlu0 %v1963
        %v1965 = vpop.xlane.xlu0 %1964
        %v1966 = vsel %vm534, %v1960, 0.0
        %1967 = vadd.xlane.f32.xlu0 %v1966
        %v1968 = vpop.xlane.xlu0 %1967
        %v1969 = vsel %vm534, %v1961, 0.0
        %1970 = vadd.xlane.f32.xlu0 %v1969
        %v1971 = vpop.xlane.xlu0 %1970
        %v1972 = vsel %vm534, %v1962, 0.0
        %1973 = vadd.xlane.f32.xlu0 %v1972
        %v1974 = vpop.xlane.xlu0 %1973
        %v1975 = vmul.f32 %v1965, %v1671
        %v1976 = vmul.f32 %v1968, %v1671
        %v1977 = vmul.f32 %v1971, %v1671
        %v1978 = vmul.f32 %v1974, %v1671
        %v1979 = vadd.f32 %v1975, 1e-12
        %v1980 = vadd.f32 %v1976, 1e-12
        %v1981 = vadd.f32 %v1977, 1e-12
        %v1982 = vadd.f32 %v1978, 1e-12
        %v1983 = vrsqrt.pop %v1979
        %v1984 = vrsqrt.pop %v1980
        %v1985 = vrsqrt.pop %v1981
        %v1986 = vrsqrt.pop %v1982
        %v1987 = vmul.f32 %v1955, %v1983
        %v1988 = vmul.f32 %v1956, %v1984
        %v1989 = vmul.f32 %v1957, %v1985
        %v1990 = vmul.f32 %v1958, %v1986
        %v1991 = vlaneseq
        %v1992 = vshrl.u32 %v1991, 7
        %v1993 = vsub.s32 6, %v1992
        %v1994 = vrot.slane %v511, %v1993
        %v1995 = vmul.f32 %v1987, %v1994
        %v1996 = vmul.f32 %v1988, %v1994
        %v1997 = vmul.f32 %v1989, %v1994
        %v1998 = vmul.f32 %v1990, %v1994
        %v1999 = vlaneseq
        %v2000 = vshrl.u32 %v1999, 7
        %v2001 = vsub.s32 7, %v2000
        %v2002 = vrot.slane %v511, %v2001
        %v2003 = vadd.f32 %v1995, %v2002
        %v2004 = vadd.f32 %v1996, %v2002
        %v2005 = vadd.f32 %v1997, %v2002
        %v2006 = vadd.f32 %v1998, %v2002
        %2007 = vst.msk [vmem:[#allocation2] sm:$0xff] %vm534, %v2003
        %2008 = vst.msk [vmem:[#allocation2 + $0x8] sm:$0xff] %vm534, %v2004
        %2009 = vst.msk [vmem:[#allocation2 + $0x10] sm:$0xff] %vm534, %v2005
        %2010 = vst.msk [vmem:[#allocation2 + $0x18] sm:$0xff] %vm534, %v2006
        %p2011 = scmp.eq.s32.totalorder %s22, 1
        // Predicated region
        $region65: #{sbert_forward.1} parent=59 // pred_check
          %p2012 = pneg %p2011
        $region66: #{sbert_forward.1} parent=59 // pred_check_branch
          %2014 = sbr.rel (%p2012) target = $region68
        $region67: #{sbert_forward.1} parent=59 // pred_region
          %v2015 = vld [vmem:[%s2] sm:$0xf]
          %v2016 = vlaneseq
          %v2017 = vshrl.u32 %v2016, 7
          %v2018 = vsub.s32 0, %v2017
          %v2019 = vrot.slane %v2015, %v2018
          %2021 = vbcast.lane.b32.xlu0 %v2019, 256
          %v2022 = vpop.permute.xlu0 %2021
          %v2023 = vlaneseq
          %v2024 = vshrl.u32 %v2023, 7
          %v2025 = vsub.s32 1, %v2024
          %v2026 = vrot.slane %v2015, %v2025
          %2028 = vbcast.lane.b32.xlu0 %v2026, 256
          %v2029 = vpop.permute.xlu0 %2028
          %v2030 = vlaneseq
          %v2031 = vshrl.u32 %v2030, 7
          %v2032 = vsub.s32 2, %v2031
          %v2033 = vrot.slane %v2015, %v2032
          %2035 = vbcast.lane.b32.xlu0 %v2033, 256
          %v2036 = vpop.permute.xlu0 %2035
          %v2037 = vlaneseq
          %v2038 = vshrl.u32 %v2037, 7
          %v2039 = vsub.s32 3, %v2038
          %v2040 = vrot.slane %v2015, %v2039
          %2042 = vbcast.lane.b32.xlu0 %v2040, 256
          %v2043 = vpop.permute.xlu0 %2042
          %v2044 = vmul.f32 %v2003, %v2022
          %v2045 = vmul.f32 %v2004, %v2029
          %v2046 = vmul.f32 %v2005, %v2036
          %v2047 = vmul.f32 %v2006, %v2043
          %v2048 = vsel %vm534, %v2044, 0.0
          %v2049 = vrot.slane %v2048, 4
          %v2050 = vadd.f32 %v2048, %v2049
          %v2051 = vrot.slane %v2050, 2
          %v2052 = vadd.f32 %v2050, %v2051
          %v2053 = vrot.slane %v2052, 1
          %v2054 = vadd.f32 %v2052, %v2053
          %v2055 = vsel %vm534, %v2045, 0.0
          %v2056 = vrot.slane %v2055, 4
          %v2057 = vadd.f32 %v2055, %v2056
          %v2058 = vrot.slane %v2057, 2
          %v2059 = vadd.f32 %v2057, %v2058
          %v2060 = vrot.slane %v2059, 1
          %v2061 = vadd.f32 %v2059, %v2060
          %v2062 = vsel %vm534, %v2046, 0.0
          %v2063 = vrot.slane %v2062, 4
          %v2064 = vadd.f32 %v2062, %v2063
          %v2065 = vrot.slane %v2064, 2
          %v2066 = vadd.f32 %v2064, %v2065
          %v2067 = vrot.slane %v2066, 1
          %v2068 = vadd.f32 %v2066, %v2067
          %v2069 = vsel %vm534, %v2047, 0.0
          %v2070 = vrot.slane %v2069, 4
          %v2071 = vadd.f32 %v2069, %v2070
          %v2072 = vrot.slane %v2071, 2
          %v2073 = vadd.f32 %v2071, %v2072
          %v2074 = vrot.slane %v2073, 1
          %v2075 = vadd.f32 %v2073, %v2074
          %v2076 = vmul.f32 %v2054, %v2068
          %v2077 = vmul.f32 %v2061, %v2075
          %vm2080 = vcmask 1041409
          %v2081 = vsel %vm2080, %v2077, %v2076
          %vm2083 = vcmask 254976
          %v2084 = vsel %vm2083, %v2081, 0.0
          %2085 = vadd.xlane.f32.xlu0 %v2084
          %v2086 = vpop.xlane.xlu0 %2085
          %v2087 = vmul.f32 %v2054, %v2054
          %v2088 = vmul.f32 %v2061, %v2061
          %v2091 = vsel %vm2080, %v2088, %v2087
          %v2093 = vsel %vm2083, %v2091, 0.0
          %2094 = vadd.xlane.f32.xlu0 %v2093
          %v2095 = vpop.xlane.xlu0 %2094
          %v2096 = vrsqrt.pop %v2095
          %v2097 = vmul.f32 %v2095, %v2096
          %vm2098 = vcmp.eq.f32.partialorder %v2095, inf
          %v2099 = vsel %vm2098, %v2095, %v2097
          %vm2100 = vcmp.eq.f32.partialorder %v2095, 0.0
          %v2101 = vand.u32 %v2095, 2147483648
          %v2102 = vsel %vm2100, %v2101, %v2099
          %v2103 = vmul.f32 %v2068, %v2068
          %v2104 = vmul.f32 %v2075, %v2075
          %v2107 = vsel %vm2080, %v2104, %v2103
          %v2109 = vsel %vm2083, %v2107, 0.0
          %2110 = vadd.xlane.f32.xlu0 %v2109
          %v2111 = vpop.xlane.xlu0 %2110
          %v2112 = vrsqrt.pop %v2111
          %v2113 = vmul.f32 %v2111, %v2112
          %vm2114 = vcmp.eq.f32.partialorder %v2111, inf
          %v2115 = vsel %vm2114, %v2111, %v2113
          %vm2116 = vcmp.eq.f32.partialorder %v2111, 0.0
          %v2117 = vand.u32 %v2111, 2147483648
          %v2118 = vsel %vm2116, %v2117, %v2115
          %v2119 = vmax.f32 %v2102, 1e-08
          %v2120 = vmax.f32 %v2118, 1e-08
          %v2121 = vmul.f32 %v2119, %v2120
          %v2122 = vrcp.pop %v2121
          %v2123 = vmul.f32 %v2086, %v2122
          %v2124 = vld [vmem:[%s3] sm:$0x3]
          %v2125 = vsub.f32 %v2123, %v2124
          %v2126 = vmul.f32 %v2125, %v2125
          %vm2127 = vcmask 1024
          %v2128 = vsel %vm2127, %v2126, 0.0
          %2129 = vadd.xlane.f32.xlu0 %v2128
          %v2130 = vpop.xlane.xlu0 %2129
          %v2131 = vrot.slane %v2130, 4
          %v2132 = vadd.f32 %v2130, %v2131
          %v2133 = vrot.slane %v2132, 2
          %v2134 = vadd.f32 %v2132, %v2133
          %v2135 = vrot.slane %v2134, 1
          %v2136 = vadd.f32 %v2134, %v2135
          %s2137 = vtos %v2136
          %v2138 = vstv %s2137
          %v2139 = vmul.f32 %v2138, 0.5
          %vm2140 = vcmask 0
          %2141 = vst.msk [vmem:[#allocation3] sm:$0x1] %vm2140, %v2139
        $region68: #{sbert_forward.1} parent=59 // pred_fallthru
          _
        // Predicated region
        $region69: #{sbert_forward.1} parent=59 // pred_check
          %p2142 = pneg %p270
        $region70: #{sbert_forward.1} parent=59 // pred_check_branch
          %2144 = sbr.rel (%p2142) target = $region72
        $region71: #{sbert_forward.1} parent=59 // pred_region
          %s2146 = ssub.s32 16, 16
          %2147 = vsyncadd [#allocation4], %s2146
          %s2149 = sshll.u32 [#allocation3], 4
          %s2150 = int_to_ptr.vmem [resolvable:$true] %s2149
          %2152 = dma.vmem_to_hbm [thread:$0]  %s2150, 16, %s10, [#allocation4]
        $region72: #{sbert_forward.1} parent=59 // pred_fallthru
          _
        // Predicated region
        $region73: #{sbert_forward.1} parent=59 // pred_check
          %p2153 = pneg %p270
        $region74: #{sbert_forward.1} parent=59 // pred_check_branch
          %2155 = sbr.rel (%p2153) target = $region76
        $region75: #{sbert_forward.1} parent=59 // pred_region
          %2156 = dma.done [#allocation4], 16
        $region76: #{sbert_forward.1} parent=59 // pred_fallthru
          _
      $region60: #{sbert_forward.1} parent=5 // pred_fallthru
        _
      %p2157 = scmp.le.s32.totalorder 2, %s17
      // Predicated region
      $region77: #{sbert_forward.1} parent=5 // pred_check
        %p2158 = pneg %p2157
      $region78: #{sbert_forward.1} parent=5 // pred_check_branch
        %2160 = sbr.rel (%p2158) target = $region80
      $region79: #{sbert_forward.1} parent=5 // pred_region
        %s2161 = ssub.s32 %s17, 2
      $region80: #{sbert_forward.1} parent=5 // pred_fallthru
        _
    $region6: #{sbert_forward.1} parent=1 // loop_footer
      %s21 = sadd.s32 1, %s17
    $region7: #{sbert_forward.1} parent=1 // loop_footer_branch
      %16 = sbr.rel target = $region3
    $region8: #{sbert_forward.1} parent=1 // loop_exit
      _
    %2162 = vsyncpa [#allocation4], 1
    %s2163 = scalar_lea.sflag [#allocation4], 1
    %2164 = vsyncpa %s2163, 1

</llo_original>
